<compile_context>
chip_gen: v6e
topology: v6e:2x2x1
jax: 0.10.0
libtpu: 0.0.40
codegen_flags: <defaults>
</compile_context>

<pallas_src>
import numpy as np
import jax
import jax.numpy as jnp
from jax.experimental import pallas as pl
from jax.experimental.pallas import tpu as pltpu


# ----------------------------- Pallas kernel ---------------------------------

def _spatcnn_kernel(rstack_ref, n1_ref, pstack_ref, m2_ref, bias_ref, x_ref, o_ref):
    # rstack_ref: VMEM (3H, h)        row-upsample matrix, stacked over dy (with zero-pad rows)
    # n1_ref:     VMEM (3, C*w, C*W)  layer-1 mixing (col-upsample + dx shift + Cin->Cout), per dy
    # pstack_ref: VMEM (3H, H)        row-shift matrices (zero padded), stacked over dy
    # m2_ref:     VMEM (3, C*W, C*W)  layer-2 mixing (dx shift + Cin->Cout), per dy
    # bias_ref:   VMEM (2, C*W)       lane-replicated biases (row 0: conv1, row 1: conv2)
    # x_ref:      VMEM (h, C*w)       one image, channels packed along lanes
    # o_ref:      VMEM (H, C*W)       output, channels packed along lanes (lane-dense store)
    H = o_ref.shape[0]
    b = bias_ref[...]                                                       # (2, C*W)

    # ---- layer 1: bilinear upsample + conv1, folded into 4 MXU matmuls ------
    a1 = jnp.dot(rstack_ref[...], x_ref[...],
                 preferred_element_type=jnp.float32)                        # (3H, C*w)
    acc = jnp.dot(a1[0:H, :], n1_ref[0], preferred_element_type=jnp.float32)
    for dy in (1, 2):
        acc = acc + jnp.dot(a1[dy * H:(dy + 1) * H, :], n1_ref[dy],
                            preferred_element_type=jnp.float32)
    y1 = jnp.maximum(acc + b[0:1, :], 0.0)                                  # (H, C*W), stays in VMEM

    # ---- layer 2: conv2, folded into 4 MXU matmuls ---------------------------
    a2 = jnp.dot(pstack_ref[...], y1, preferred_element_type=jnp.float32)   # (3H, C*W)
    acc2 = jnp.dot(a2[0:H, :], m2_ref[0], preferred_element_type=jnp.float32)
    for dy in (1, 2):
        acc2 = acc2 + jnp.dot(a2[dy * H:(dy + 1) * H, :], m2_ref[dy],
                              preferred_element_type=jnp.float32)
    o_ref[...] = jnp.maximum(acc2 + b[1:2, :], 0.0)                         # unmasked 128-lane store


# ----------------------------- host-side constant matrices --------------------

def _bilinear_matrix(n_in, n_out):
    """Interpolation matrix matching F.interpolate(mode='bilinear', align_corners=False)."""
    scale = n_in / n_out
    M = np.zeros((n_out, n_in), dtype=np.float64)
    for o in range(n_out):
        src = (o + 0.5) * scale - 0.5
        if src < 0.0:
            src = 0.0
        i0 = min(int(np.floor(src)), n_in - 1)
        i1 = min(i0 + 1, n_in - 1)
        lam = src - i0
        M[o, i0] += 1.0 - lam
        M[o, i1] += lam
    return M


def _row_shift(n, d):
    """P such that (P @ M)[o, :] = M[o + d, :] when in range, else 0."""
    P = np.zeros((n, n), dtype=np.float64)
    for o in range(n):
        a = o + d
        if 0 <= a < n:
            P[o, a] = 1.0
    return P


def _col_shift(n, d):
    """S such that (M @ S)[:, j] = M[:, j + d] when in range, else 0."""
    S = np.zeros((n, n), dtype=np.float64)
    for j in range(n):
        i = j + d
        if 0 <= i < n:
            S[i, j] = 1.0
    return S


# ----------------------------- JAX wrapper -------------------------------------

def init_spatcnn_params(key, n_bands):
    """Deterministic params matching nn.Conv2d(n_bands, n_bands, 3) shapes."""
    k1, k2, k3, k4 = jax.random.split(key, 4)
    bound = 1.0 / np.sqrt(n_bands * 9)
    w1 = jax.random.uniform(k1, (n_bands, n_bands, 3, 3), jnp.float32, -bound, bound)
    b1 = jax.random.uniform(k2, (n_bands,), jnp.float32, -bound, bound)
    w2 = jax.random.uniform(k3, (n_bands, n_bands, 3, 3), jnp.float32, -bound, bound)
    b2 = jax.random.uniform(k4, (n_bands,), jnp.float32, -bound, bound)
    return {"w1": w1, "b1": b1, "w2": w2, "b2": b2}


def spatcnn_forward(params, x_lr, x_hr, scale_ratio):
    """x_lr: (N, n_bands, h, w) NCHW. x_hr is unused, as in the reference forward."""
    del x_hr
    N, C, h, w = x_lr.shape
    H, W = int(round(h * scale_ratio)), int(round(w * scale_ratio))
    HIGH = jax.lax.Precision.HIGHEST

    # ---- constant structural matrices (exact 0/1 shifts + bilinear weights) --
    R = _bilinear_matrix(h, H)                                           # (H, h)
    Cm = _bilinear_matrix(w, W)                                          # (W, w)
    rstack = np.concatenate([_row_shift(H, dy - 1) @ R for dy in range(3)], 0)   # (3H, h)
    pstack = np.concatenate([_row_shift(H, dy - 1) for dy in range(3)], 0)       # (3H, H)
    S = np.stack([_col_shift(W, dx - 1) for dx in range(3)])                     # (3, W, W)

    rstack = jnp.asarray(rstack, jnp.float32)
    pstack = jnp.asarray(pstack, jnp.float32)
    S_j = jnp.asarray(S, jnp.float32)
    CmT = jnp.asarray(Cm.T, jnp.float32)                                 # (w, W)

    # ---- fold conv weights (and, for layer 1, the column upsample) -----------
    w1 = params["w1"].astype(jnp.float32)                                # (Cout, Cin, 3, 3)
    w2 = params["w2"].astype(jnp.float32)
    # t[y,i,o,a,b] = sum_dx w[o,i,y,dx] * S[dx][a,b]
    t1 = jnp.einsum("oiyx,xab->yioab", w1, S_j, precision=HIGH)
    n1 = jnp.einsum("ja,yioab->yiojb", CmT, t1, precision=HIGH)          # (3, Cin, Cout, w, W)
    n1 = n1.transpose(0, 1, 3, 2, 4).reshape(3, C * w, C * W)            # rows (ci, j), cols (co, c)
    m2 = jnp.einsum("oiyx,xab->yioab", w2, S_j, precision=HIGH)          # (3, Cin, Cout, W, W)
    m2 = m2.transpose(0, 1, 3, 2, 4).reshape(3, C * W, C * W)

    bias = jnp.stack([jnp.repeat(params["b1"].astype(jnp.float32), W),
                      jnp.repeat(params["b2"].astype(jnp.float32), W)])  # (2, C*W)

    # ---- lane-dense kernel I/O layout: (N, rows, C*cols) ---------------------
    x_packed = jnp.transpose(x_lr.astype(jnp.float32), (0, 2, 1, 3)).reshape(N, h, C * w)

    out_packed = pl.pallas_call(
        _spatcnn_kernel,
        out_shape=jax.ShapeDtypeStruct((N, H, C * W), jnp.float32),
        grid=(N,),
        in_specs=[
            pl.BlockSpec((3 * H, h), lambda n: (0, 0)),             # rstack (fetched once)
            pl.BlockSpec((3, C * w, C * W), lambda n: (0, 0, 0)),   # layer-1 mixing
            pl.BlockSpec((3 * H, H), lambda n: (0, 0)),             # row-shift stack
            pl.BlockSpec((3, C * W, C * W), lambda n: (0, 0, 0)),   # layer-2 mixing
            pl.BlockSpec((2, C * W), lambda n: (0, 0)),             # lane-replicated biases
            pl.BlockSpec((None, h, C * w), lambda n: (n, 0, 0)),    # one packed image
        ],
        out_specs=pl.BlockSpec((None, H, C * W), lambda n: (n, 0, 0)),
        compiler_params=pltpu.CompilerParams(
            dimension_semantics=("parallel",),          # batch split across both TCs on v7x
            vmem_limit_bytes=32 * 1024 * 1024),
    )(rstack, n1, pstack, m2, bias, x_packed)

    # layout plumbing back to NCHW (outside the kernel, tiny)
    x_out = out_packed.reshape(N, H, C, W).transpose(0, 2, 1, 3)
    return (x_out, 0, 0, 0, 0, 0)


# ----------------------------- reference check --------------------------------

def _ref_conv_relu_nchw(x_nchw, wgt, b):
    y = jax.lax.conv_general_dilated(
        x_nchw, wgt, window_strides=(1, 1), padding=((1, 1), (1, 1)),
        dimension_numbers=("NCHW", "OIHW", "NCHW"),
        precision=jax.lax.Precision.HIGHEST)
    return jax.nn.relu(y + b[None, :, None, None])


if __name__ == "__main__":
    scale_ratio = 2
    n_select_bands = 4
    n_bands = 4
    N, h, w = 2, 16, 16

    key = jax.random.PRNGKey(0)
    kp, kx, ky = jax.random.split(key, 3)
    params = init_spatcnn_params(kp, n_bands)
    x_lr = jax.random.normal(kx, (N, n_bands, h, w), jnp.float32)
    x_hr = jax.random.normal(ky, (N, n_select_bands, h * scale_ratio, w * scale_ratio),
                             jnp.float32)

    out = spatcnn_forward(params, x_lr, x_hr, scale_ratio)
    x_out = jax.block_until_ready(out[0])
    assert x_out.shape == (N, n_bands, h * scale_ratio, w * scale_ratio)

    # Reference: same separable bilinear upsample + lax convs at highest precision.
    Rr = jnp.asarray(_bilinear_matrix(h, h * scale_ratio), jnp.float32)
    Cc = jnp.asarray(_bilinear_matrix(w, w * scale_ratio), jnp.float32)
    up = jnp.einsum("oh,nchw->ncow", Rr, x_lr, precision=jax.lax.Precision.HIGHEST)
    up = jnp.einsum("pw,ncow->ncop", Cc, up, precision=jax.lax.Precision.HIGHEST)
    ref = _ref_conv_relu_nchw(up, params["w1"], params["b1"])
    ref = _ref_conv_relu_nchw(ref, params["w2"], params["b2"])
    ref = jax.block_until_ready(ref)

    # Tolerance leaves headroom for MXU f32-pass differences between the in-kernel
    # folded matmuls and the XLA reference; structural bugs would be O(1) errors.
    assert bool(jnp.allclose(x_out, ref, atol=5e-3, rtol=5e-3)), \
        "Pallas fused SpatCNN mismatch vs reference"
    print("KERNEL_OK")
</pallas_src>

<mosaic_0001>
module attributes {stable_mosaic.version = 11 : i64} {
  func.func @_spatcnn_kernel(%arg0: i32, %arg1: memref<96x16xf32, #tpu.memory_space<vmem>>, %arg2: memref<3x64x128xf32, #tpu.memory_space<vmem>>, %arg3: memref<96x32xf32, #tpu.memory_space<vmem>>, %arg4: memref<3x128x128xf32, #tpu.memory_space<vmem>>, %arg5: memref<2x128xf32, #tpu.memory_space<vmem>>, %arg6: memref<1x16x64xf32, #tpu.memory_space<vmem>>, %arg7: memref<1x32x128xf32, #tpu.memory_space<vmem>>) attributes {dimension_semantics = [#tpu.dimension_semantics<parallel>], iteration_bounds = array<i64: 2>, scalar_prefetch = 0 : i64, scratch_operands = 0 : i64, tpu.core_type = #tpu.core_type<tc>, window_params = [{pipeline_mode = #tpu.pipeline_mode<synchronous>, transform_indices = @transform_0, window_bounds = array<i64: 96, 16>}, {pipeline_mode = #tpu.pipeline_mode<synchronous>, transform_indices = @transform_1, window_bounds = array<i64: 3, 64, 128>}, {pipeline_mode = #tpu.pipeline_mode<synchronous>, transform_indices = @transform_2, window_bounds = array<i64: 96, 32>}, {pipeline_mode = #tpu.pipeline_mode<synchronous>, transform_indices = @transform_3, window_bounds = array<i64: 3, 128, 128>}, {pipeline_mode = #tpu.pipeline_mode<synchronous>, transform_indices = @transform_4, window_bounds = array<i64: 2, 128>}, {transform_indices = @transform_5, window_bounds = array<i64: 1, 16, 64>}, {transform_indices = @transform_6, window_bounds = array<i64: 1, 32, 128>}]} {
    %c0 = arith.constant 0 : index
    %c0_0 = arith.constant 0 : index
    %0 = vector.load %arg5[%c0, %c0_0] : memref<2x128xf32, #tpu.memory_space<vmem>>, vector<2x128xf32>
    %c0_1 = arith.constant 0 : index
    %c0_2 = arith.constant 0 : index
    %1 = vector.load %arg1[%c0_1, %c0_2] : memref<96x16xf32, #tpu.memory_space<vmem>>, vector<96x16xf32>
    %c0_3 = arith.constant 0 : index
    %c0_4 = arith.constant 0 : index
    %c0_5 = arith.constant 0 : index
    %2 = vector.load %arg6[%c0_3, %c0_4, %c0_5] : memref<1x16x64xf32, #tpu.memory_space<vmem>>, vector<1x16x64xf32>
    %3 = vector.shape_cast %2 : vector<1x16x64xf32> to vector<16x64xf32>
    %cst = arith.constant dense<0.000000e+00> : vector<96x64xf32>
    %4 = tpu.matmul %1, %3, %cst {dimension_numbers = #tpu.dot_dimension_numbers<[1], [0], [0], [1], [0, 0, 1, 1], [], []>} : vector<96x16xf32>, vector<16x64xf32>, vector<96x64xf32> -> vector<96x64xf32>
    %5 = vector.extract_strided_slice %4 {offsets = [0, 0], sizes = [32, 64], strides = [1, 1]} : vector<96x64xf32> to vector<32x64xf32>
    %c0_6 = arith.constant 0 : index
    %c0_7 = arith.constant 0 : index
    %c0_8 = arith.constant 0 : index
    %6 = vector.load %arg2[%c0_6, %c0_7, %c0_8] : memref<3x64x128xf32, #tpu.memory_space<vmem>>, vector<1x64x128xf32>
    %7 = vector.shape_cast %6 : vector<1x64x128xf32> to vector<64x128xf32>
    %cst_9 = arith.constant dense<0.000000e+00> : vector<32x128xf32>
    %8 = tpu.matmul %5, %7, %cst_9 {dimension_numbers = #tpu.dot_dimension_numbers<[1], [0], [0], [1], [0, 0, 1, 1], [], []>} : vector<32x64xf32>, vector<64x128xf32>, vector<32x128xf32> -> vector<32x128xf32>
    %9 = vector.extract_strided_slice %4 {offsets = [32, 0], sizes = [32, 64], strides = [1, 1]} : vector<96x64xf32> to vector<32x64xf32>
    %c1 = arith.constant 1 : index
    %c0_10 = arith.constant 0 : index
    %c0_11 = arith.constant 0 : index
    %10 = vector.load %arg2[%c1, %c0_10, %c0_11] : memref<3x64x128xf32, #tpu.memory_space<vmem>>, vector<1x64x128xf32>
    %11 = vector.shape_cast %10 : vector<1x64x128xf32> to vector<64x128xf32>
    %cst_12 = arith.constant dense<0.000000e+00> : vector<32x128xf32>
    %12 = tpu.matmul %9, %11, %cst_12 {dimension_numbers = #tpu.dot_dimension_numbers<[1], [0], [0], [1], [0, 0, 1, 1], [], []>} : vector<32x64xf32>, vector<64x128xf32>, vector<32x128xf32> -> vector<32x128xf32>
    %13 = arith.addf %8, %12 : vector<32x128xf32>
    %14 = vector.extract_strided_slice %4 {offsets = [64, 0], sizes = [32, 64], strides = [1, 1]} : vector<96x64xf32> to vector<32x64xf32>
    %c2 = arith.constant 2 : index
    %c0_13 = arith.constant 0 : index
    %c0_14 = arith.constant 0 : index
    %15 = vector.load %arg2[%c2, %c0_13, %c0_14] : memref<3x64x128xf32, #tpu.memory_space<vmem>>, vector<1x64x128xf32>
    %16 = vector.shape_cast %15 : vector<1x64x128xf32> to vector<64x128xf32>
    %cst_15 = arith.constant dense<0.000000e+00> : vector<32x128xf32>
    %17 = tpu.matmul %14, %16, %cst_15 {dimension_numbers = #tpu.dot_dimension_numbers<[1], [0], [0], [1], [0, 0, 1, 1], [], []>} : vector<32x64xf32>, vector<64x128xf32>, vector<32x128xf32> -> vector<32x128xf32>
    %18 = arith.addf %13, %17 : vector<32x128xf32>
    %19 = vector.extract_strided_slice %0 {offsets = [0, 0], sizes = [1, 128], strides = [1, 1]} : vector<2x128xf32> to vector<1x128xf32>
    %20 = vector.broadcast %19 : vector<1x128xf32> to vector<32x128xf32>
    %21 = arith.addf %18, %20 : vector<32x128xf32>
    %cst_16 = arith.constant 0.000000e+00 : f32
    %22 = vector.broadcast %cst_16 : f32 to vector<32x128xf32>
    %23 = arith.maximumf %21, %22 : vector<32x128xf32>
    %c0_17 = arith.constant 0 : index
    %c0_18 = arith.constant 0 : index
    %24 = vector.load %arg3[%c0_17, %c0_18] : memref<96x32xf32, #tpu.memory_space<vmem>>, vector<96x32xf32>
    %cst_19 = arith.constant dense<0.000000e+00> : vector<96x128xf32>
    %25 = tpu.matmul %24, %23, %cst_19 {dimension_numbers = #tpu.dot_dimension_numbers<[1], [0], [0], [1], [0, 0, 1, 1], [], []>} : vector<96x32xf32>, vector<32x128xf32>, vector<96x128xf32> -> vector<96x128xf32>
    %26 = vector.extract_strided_slice %25 {offsets = [0, 0], sizes = [32, 128], strides = [1, 1]} : vector<96x128xf32> to vector<32x128xf32>
    %c0_20 = arith.constant 0 : index
    %c0_21 = arith.constant 0 : index
    %c0_22 = arith.constant 0 : index
    %27 = vector.load %arg4[%c0_20, %c0_21, %c0_22] : memref<3x128x128xf32, #tpu.memory_space<vmem>>, vector<1x128x128xf32>
    %28 = vector.shape_cast %27 : vector<1x128x128xf32> to vector<128x128xf32>
    %cst_23 = arith.constant dense<0.000000e+00> : vector<32x128xf32>
    %29 = tpu.matmul %26, %28, %cst_23 {dimension_numbers = #tpu.dot_dimension_numbers<[1], [0], [0], [1], [0, 0, 1, 1], [], []>} : vector<32x128xf32>, vector<128x128xf32>, vector<32x128xf32> -> vector<32x128xf32>
    %30 = vector.extract_strided_slice %25 {offsets = [32, 0], sizes = [32, 128], strides = [1, 1]} : vector<96x128xf32> to vector<32x128xf32>
    %c1_24 = arith.constant 1 : index
    %c0_25 = arith.constant 0 : index
    %c0_26 = arith.constant 0 : index
    %31 = vector.load %arg4[%c1_24, %c0_25, %c0_26] : memref<3x128x128xf32, #tpu.memory_space<vmem>>, vector<1x128x128xf32>
    %32 = vector.shape_cast %31 : vector<1x128x128xf32> to vector<128x128xf32>
    %cst_27 = arith.constant dense<0.000000e+00> : vector<32x128xf32>
    %33 = tpu.matmul %30, %32, %cst_27 {dimension_numbers = #tpu.dot_dimension_numbers<[1], [0], [0], [1], [0, 0, 1, 1], [], []>} : vector<32x128xf32>, vector<128x128xf32>, vector<32x128xf32> -> vector<32x128xf32>
    %34 = arith.addf %29, %33 : vector<32x128xf32>
    %35 = vector.extract_strided_slice %25 {offsets = [64, 0], sizes = [32, 128], strides = [1, 1]} : vector<96x128xf32> to vector<32x128xf32>
    %c2_28 = arith.constant 2 : index
    %c0_29 = arith.constant 0 : index
    %c0_30 = arith.constant 0 : index
    %36 = vector.load %arg4[%c2_28, %c0_29, %c0_30] : memref<3x128x128xf32, #tpu.memory_space<vmem>>, vector<1x128x128xf32>
    %37 = vector.shape_cast %36 : vector<1x128x128xf32> to vector<128x128xf32>
    %cst_31 = arith.constant dense<0.000000e+00> : vector<32x128xf32>
    %38 = tpu.matmul %35, %37, %cst_31 {dimension_numbers = #tpu.dot_dimension_numbers<[1], [0], [0], [1], [0, 0, 1, 1], [], []>} : vector<32x128xf32>, vector<128x128xf32>, vector<32x128xf32> -> vector<32x128xf32>
    %39 = arith.addf %34, %38 : vector<32x128xf32>
    %40 = vector.extract_strided_slice %0 {offsets = [1, 0], sizes = [1, 128], strides = [1, 1]} : vector<2x128xf32> to vector<1x128xf32>
    %41 = vector.broadcast %40 : vector<1x128xf32> to vector<32x128xf32>
    %42 = arith.addf %39, %41 : vector<32x128xf32>
    %cst_32 = arith.constant 0.000000e+00 : f32
    %43 = vector.broadcast %cst_32 : f32 to vector<32x128xf32>
    %44 = arith.maximumf %42, %43 : vector<32x128xf32>
    %c0_33 = arith.constant 0 : index
    %c0_34 = arith.constant 0 : index
    %c0_35 = arith.constant 0 : index
    %45 = vector.load %arg7[%c0_33, %c0_34, %c0_35] : memref<1x32x128xf32, #tpu.memory_space<vmem>>, vector<1x32x128xf32>
    %46 = vector.shape_cast %45 : vector<1x32x128xf32> to vector<32x128xf32>
    %47 = vector.shape_cast %44 : vector<32x128xf32> to vector<1x32x128xf32>
    tpu.vector_store %arg7[%c0_33, %c0_34, %c0_35], %47 {strides = array<i32>} : memref<1x32x128xf32, #tpu.memory_space<vmem>>, vector<1x32x128xf32>,
    return
  }
  func.func @transform_0(%arg0: i32) -> (i32, i32) {
    %c0_i32 = arith.constant 0 : i32
    %c0_i32_0 = arith.constant 0 : i32
    %c0_i32_1 = arith.constant 0 : i32
    return %c0_i32, %c0_i32_0 : i32, i32
  }
  func.func @transform_1(%arg0: i32) -> (i32, i32, i32) {
    %c0_i32 = arith.constant 0 : i32
    %c0_i32_0 = arith.constant 0 : i32
    %c0_i32_1 = arith.constant 0 : i32
    %c0_i32_2 = arith.constant 0 : i32
    return %c0_i32, %c0_i32_0, %c0_i32_1 : i32, i32, i32
  }
  func.func @transform_2(%arg0: i32) -> (i32, i32) {
    %c0_i32 = arith.constant 0 : i32
    %c0_i32_0 = arith.constant 0 : i32
    %c0_i32_1 = arith.constant 0 : i32
    return %c0_i32, %c0_i32_0 : i32, i32
  }
  func.func @transform_3(%arg0: i32) -> (i32, i32, i32) {
    %c0_i32 = arith.constant 0 : i32
    %c0_i32_0 = arith.constant 0 : i32
    %c0_i32_1 = arith.constant 0 : i32
    %c0_i32_2 = arith.constant 0 : i32
    return %c0_i32, %c0_i32_0, %c0_i32_1 : i32, i32, i32
  }
  func.func @transform_4(%arg0: i32) -> (i32, i32) {
    %c0_i32 = arith.constant 0 : i32
    %c0_i32_0 = arith.constant 0 : i32
    %c0_i32_1 = arith.constant 0 : i32
    return %c0_i32, %c0_i32_0 : i32, i32
  }
  func.func @transform_5(%arg0: i32) -> (i32, i32, i32) {
    %c0_i32 = arith.constant 0 : i32
    %c0_i32_0 = arith.constant 0 : i32
    %c0_i32_1 = arith.constant 0 : i32
    return %arg0, %c0_i32, %c0_i32_0 : i32, i32, i32
  }
  func.func @transform_6(%arg0: i32) -> (i32, i32, i32) {
    %c0_i32 = arith.constant 0 : i32
    %c0_i32_0 = arith.constant 0 : i32
    %c0_i32_1 = arith.constant 0 : i32
    return %arg0, %c0_i32, %c0_i32_0 : i32, i32, i32
  }
}

</mosaic_0001>

<llo_original>
// kernel: tpu_custom_call.1
$region0: #{tpu_custom_call.1}
  #allocation0 [shape = 'u32[]', space=smem, size = 0x4, offset = 0x4, fixed_abs, tag = 'smem constant byte address 0x4 - core index']
  #allocation1 [shape = 'u32[144,128]{1,0:T(1,128)}', space=vmem, size = 0x12000, scoped, tag = 'internal scratch']
  %s0 = inlined_call_operand.vmem [shape: f32[96,16], index: 0, kind: input, shape index: {}]
  %s1 = inlined_call_operand.vmem [shape: f32[3,64,128], index: 1, kind: input, shape index: {}]
  %s2 = inlined_call_operand.vmem [shape: f32[96,32], index: 2, kind: input, shape index: {}]
  %s3 = inlined_call_operand.hbm [shape: f32[3,128,128], index: 3, kind: input, shape index: {}]
  %s4 = inlined_call_operand.vmem [shape: f32[2,128], index: 4, kind: input, shape index: {}]
  %s5 = inlined_call_operand.hbm [shape: f32[2,16,64], index: 5, kind: input, shape index: {}]
  %s6 = inlined_call_operand.hbm [shape: f32[2,32,128], index: 6, kind: output, shape index: {}]
  %s7 = sld [smem:[#allocation0]]
  $region65: #{tpu_custom_call.1} parent=0
    _
  %s9 = ssub.s32 1, %s7
  %s10 = scalar_select 0, %s9, %s7
  $region1: #{tpu_custom_call.1} parent=0
    #allocation2 [shape = 'u8[196608]{0}', space=vmem, size = 0x30000, scoped, tag = 'input window, operand 3, single buffered']
    #allocation3 [shape = 's32[2]{0}', space=sflag, size = 0x8, scoped, tag = 'scoped memory for tpu_custom_call.1']
    #allocation4 [shape = 's32[2]{0}', space=sflag, size = 0x8, scoped, tag = 'scoped memory for tpu_custom_call.1']
    #allocation5 [shape = 'u8[16384]{0}', space=vmem, size = 0x4000, scoped, tag = 'input window, operand 5']
    #allocation6 [shape = 's32[2]{0}', space=sflag, size = 0x8, scoped, tag = 'scoped memory for tpu_custom_call.1']
    #allocation7 [shape = 'u8[32768]{0}', space=vmem, size = 0x8000, scoped, tag = 'output window, operand 0']
    %11 = vsyncpa [#allocation3], 0
    %12 = vsyncpa [#allocation6], 0
    %s13 = scalar_lea.sflag [#allocation6], 1
    %14 = vsyncpa %s13, 0
    %15 = vsyncpa [#allocation4], 0
    %s16 = scalar_lea.sflag [#allocation4], 1
    %17 = vsyncpa %s16, 0
    loop: start=0, step=1, limit=4
    $region2: #{tpu_custom_call.1} parent=1 // loop_pre_header
      _
    $region3: #{tpu_custom_call.1} parent=1 // loop_header
      %s19 = sphi 0, %s23
      %p20 = scmp.ge.s32.totalorder %s19, 4
      %s27 = sphi 0, %s27
      %s29 = sphi 0, %s27
      %s30 = sphi 0, %s29
      %s44 = sphi 0, %s30
      %s48 = sphi 0, %s48
      %s50 = sphi 0, %s48
      %s51 = sphi 0, %s50
      %s65 = sphi 0, %s51
      %s69 = sphi 0, %s69
      %s71 = sphi 0, %s69
      %s72 = sphi 0, %s71
      %s86 = sphi 0, %s72
      %s90 = sphi 0, %s90
      %s92 = sphi 0, %s90
      %s93 = sphi 0, %s92
      %s107 = sphi 0, %s93
      %s111 = sphi 0, %s111
      %s113 = sphi 0, %s111
      %s114 = sphi 0, %s113
      %s128 = sphi 0, %s114
      %s134 = sphi 0, %s136
      %s137 = sphi 0, %s134
      %s138 = sphi 0, %s137
      %s154 = sphi 0, %s138
      %s160 = sphi 0, %s162
      %s163 = sphi 0, %s160
      %s164 = sphi 0, %s163
      %s180 = sphi 0, %s164
    $region4: #{tpu_custom_call.1} parent=1 // loop_header_branch
      %22 = sbr.rel (%p20) target = $region8
    $region5: #{tpu_custom_call.1} parent=1 // loop_body
      %s24 = ssub.s32 %s19, 1
      %s25 = ssub.s32 %s19, 2
      %s26 = sadd.s32 %s19, 1
      %s28 = sadd.s32 %s27, 1
      %p31 = scmp.eq.s32.totalorder %s19, 1
      %p32 = scmp.ne.s32.totalorder %s27, %s29
      %p33 = scmp.eq.s32.totalorder %s19, 0
      %p34 = por %p32, %p33
      %p35 = scmp.ne.s32.totalorder %s27, %s29
      %p36 = scmp.eq.s32.totalorder %s24, 1
      %p37 = por %p35, %p36
      %p38 = scmp.ne.s32.totalorder %s29, %s30
      %p39 = scmp.eq.s32.totalorder %s24, 0
      %p40 = por %p38, %p39
      %p41 = scmp.ne.s32.totalorder %s29, %s30
      %p42 = scmp.eq.s32.totalorder %s25, 1
      %p43 = por %p41, %p42
      %p45 = scmp.ne.s32.totalorder %s30, %s44
      %p46 = scmp.eq.s32.totalorder %s25, 0
      %p47 = por %p45, %p46
      %s49 = sadd.s32 %s48, 1
      %p52 = scmp.eq.s32.totalorder %s19, 1
      %p53 = scmp.ne.s32.totalorder %s48, %s50
      %p54 = scmp.eq.s32.totalorder %s19, 0
      %p55 = por %p53, %p54
      %p56 = scmp.ne.s32.totalorder %s48, %s50
      %p57 = scmp.eq.s32.totalorder %s24, 1
      %p58 = por %p56, %p57
      %p59 = scmp.ne.s32.totalorder %s50, %s51
      %p60 = scmp.eq.s32.totalorder %s24, 0
      %p61 = por %p59, %p60
      %p62 = scmp.ne.s32.totalorder %s50, %s51
      %p63 = scmp.eq.s32.totalorder %s25, 1
      %p64 = por %p62, %p63
      %p66 = scmp.ne.s32.totalorder %s51, %s65
      %p67 = scmp.eq.s32.totalorder %s25, 0
      %p68 = por %p66, %p67
      %s70 = sadd.s32 %s69, 1
      %p73 = scmp.eq.s32.totalorder %s19, 1
      %p74 = scmp.ne.s32.totalorder %s69, %s71
      %p75 = scmp.eq.s32.totalorder %s19, 0
      %p76 = por %p74, %p75
      %p77 = scmp.ne.s32.totalorder %s69, %s71
      %p78 = scmp.eq.s32.totalorder %s24, 1
      %p79 = por %p77, %p78
      %p80 = scmp.ne.s32.totalorder %s71, %s72
      %p81 = scmp.eq.s32.totalorder %s24, 0
      %p82 = por %p80, %p81
      %p83 = scmp.ne.s32.totalorder %s71, %s72
      %p84 = scmp.eq.s32.totalorder %s25, 1
      %p85 = por %p83, %p84
      %p87 = scmp.ne.s32.totalorder %s72, %s86
      %p88 = scmp.eq.s32.totalorder %s25, 0
      %p89 = por %p87, %p88
      %s91 = sadd.s32 %s90, 1
      %p94 = scmp.eq.s32.totalorder %s19, 1
      %p95 = scmp.ne.s32.totalorder %s90, %s92
      %p96 = scmp.eq.s32.totalorder %s19, 0
      %p97 = por %p95, %p96
      %p98 = scmp.ne.s32.totalorder %s90, %s92
      %p99 = scmp.eq.s32.totalorder %s24, 1
      %p100 = por %p98, %p99
      %p101 = scmp.ne.s32.totalorder %s92, %s93
      %p102 = scmp.eq.s32.totalorder %s24, 0
      %p103 = por %p101, %p102
      %p104 = scmp.ne.s32.totalorder %s92, %s93
      %p105 = scmp.eq.s32.totalorder %s25, 1
      %p106 = por %p104, %p105
      %p108 = scmp.ne.s32.totalorder %s93, %s107
      %p109 = scmp.eq.s32.totalorder %s25, 0
      %p110 = por %p108, %p109
      %s112 = sadd.s32 %s111, 1
      %p115 = scmp.eq.s32.totalorder %s19, 1
      %p116 = scmp.ne.s32.totalorder %s111, %s113
      %p117 = scmp.eq.s32.totalorder %s19, 0
      %p118 = por %p116, %p117
      %p119 = scmp.ne.s32.totalorder %s111, %s113
      %p120 = scmp.eq.s32.totalorder %s24, 1
      %p121 = por %p119, %p120
      %p122 = scmp.ne.s32.totalorder %s113, %s114
      %p123 = scmp.eq.s32.totalorder %s24, 0
      %p124 = por %p122, %p123
      %p125 = scmp.ne.s32.totalorder %s113, %s114
      %p126 = scmp.eq.s32.totalorder %s25, 1
      %p127 = por %p125, %p126
      %p129 = scmp.ne.s32.totalorder %s114, %s128
      %p130 = scmp.eq.s32.totalorder %s25, 0
      %p131 = por %p129, %p130
      %s132 = ssub.s32 %s19, %s26
      %p133 = scmp.eq.s32.totalorder %s132, 0
      %s135 = sadd.s32 %s134, 1
      %s136 = scalar_select %p133, %s134, %s135
      %p139 = pneg %p133
      %p140 = scmp.eq.s32.totalorder %s19, 1
      %p141 = por %p139, %p140
      %p142 = scmp.ne.s32.totalorder %s134, %s137
      %p143 = scmp.eq.s32.totalorder %s19, 0
      %p144 = por %p142, %p143
      %p145 = scmp.ne.s32.totalorder %s134, %s137
      %p146 = scmp.eq.s32.totalorder %s24, 1
      %p147 = por %p145, %p146
      %p148 = scmp.ne.s32.totalorder %s137, %s138
      %p149 = scmp.eq.s32.totalorder %s24, 0
      %p150 = por %p148, %p149
      %p151 = scmp.ne.s32.totalorder %s137, %s138
      %p152 = scmp.eq.s32.totalorder %s25, 1
      %p153 = por %p151, %p152
      %p155 = scmp.ne.s32.totalorder %s138, %s154
      %p156 = scmp.eq.s32.totalorder %s25, 0
      %p157 = por %p155, %p156
      %s158 = ssub.s32 %s19, %s26
      %p159 = scmp.eq.s32.totalorder %s158, 0
      %s161 = sadd.s32 %s160, 1
      %s162 = scalar_select %p159, %s160, %s161
      %p165 = pneg %p159
      %p166 = scmp.eq.s32.totalorder %s19, 1
      %p167 = por %p165, %p166
      %p168 = scmp.ne.s32.totalorder %s160, %s163
      %p169 = scmp.eq.s32.totalorder %s19, 0
      %p170 = por %p168, %p169
      %p171 = scmp.ne.s32.totalorder %s160, %s163
      %p172 = scmp.eq.s32.totalorder %s24, 1
      %p173 = por %p171, %p172
      %p174 = scmp.ne.s32.totalorder %s163, %s164
      %p175 = scmp.eq.s32.totalorder %s24, 0
      %p176 = por %p174, %p175
      %p177 = scmp.ne.s32.totalorder %s163, %s164
      %p178 = scmp.eq.s32.totalorder %s25, 1
      %p179 = por %p177, %p178
      %p181 = scmp.ne.s32.totalorder %s164, %s180
      %p182 = scmp.eq.s32.totalorder %s25, 0
      %p183 = por %p181, %p182
      %p184 = scmp.le.s32.totalorder 1, %s19
      %p185 = scmp.lt.s32.totalorder %s19, 3
      %p186 = pnand %p184, %p185
      %p187 = pneg %p186
      // Predicated region
      $region9: #{tpu_custom_call.1} parent=5 // pred_check
        _
      $region10: #{tpu_custom_call.1} parent=5 // pred_check_branch
        %189 = sbr.rel (%p186) target = $region12
      $region11: #{tpu_custom_call.1} parent=5 // pred_region
        %s190 = ssub.s32 %s19, 1
        // Predicated region
        $region13: #{tpu_custom_call.1} parent=11 // pred_check
          %p191 = pneg %p40
        $region14: #{tpu_custom_call.1} parent=11 // pred_check_branch
          %193 = sbr.rel (%p191) target = $region16
        $region15: #{tpu_custom_call.1} parent=11 // pred_region
          _
        $region16: #{tpu_custom_call.1} parent=11 // pred_fallthru
          _
        // Predicated region
        $region17: #{tpu_custom_call.1} parent=11 // pred_check
          %p194 = pneg %p61
        $region18: #{tpu_custom_call.1} parent=11 // pred_check_branch
          %196 = sbr.rel (%p194) target = $region20
        $region19: #{tpu_custom_call.1} parent=11 // pred_region
          _
        $region20: #{tpu_custom_call.1} parent=11 // pred_fallthru
          _
        // Predicated region
        $region21: #{tpu_custom_call.1} parent=11 // pred_check
          %p197 = pneg %p82
        $region22: #{tpu_custom_call.1} parent=11 // pred_check_branch
          %199 = sbr.rel (%p197) target = $region24
        $region23: #{tpu_custom_call.1} parent=11 // pred_region
          _
        $region24: #{tpu_custom_call.1} parent=11 // pred_fallthru
          _
        // Predicated region
        $region25: #{tpu_custom_call.1} parent=11 // pred_check
          %p200 = pneg %p103
        $region26: #{tpu_custom_call.1} parent=11 // pred_check_branch
          %202 = sbr.rel (%p200) target = $region28
        $region27: #{tpu_custom_call.1} parent=11 // pred_region
          %s204 = ssub.s32 6144, 6144
          %205 = vsyncadd [#allocation3], %s204
          %s206 = sshll.u32 [#allocation2], 4
          %s207 = int_to_ptr.vmem [resolvable:$true] %s206
          %212 = dma.hbm_to_vmem [thread:$0]  %s3, 6144, %s207, [#allocation3], 128, 128, 8
        $region28: #{tpu_custom_call.1} parent=11 // pred_fallthru
          _
        // Predicated region
        $region29: #{tpu_custom_call.1} parent=11 // pred_check
          %p213 = pneg %p124
        $region30: #{tpu_custom_call.1} parent=11 // pred_check_branch
          %215 = sbr.rel (%p213) target = $region32
        $region31: #{tpu_custom_call.1} parent=11 // pred_region
          _
        $region32: #{tpu_custom_call.1} parent=11 // pred_fallthru
          _
      $region12: #{tpu_custom_call.1} parent=5 // pred_fallthru
        _
      %p216 = scmp.lt.s32.totalorder %s19, 2
      // Predicated region
      $region33: #{tpu_custom_call.1} parent=5 // pred_check
        %p217 = pneg %p216
      $region34: #{tpu_custom_call.1} parent=5 // pred_check_branch
        %219 = sbr.rel (%p217) target = $region36
      $region35: #{tpu_custom_call.1} parent=5 // pred_region
        // Predicated region
        $region37: #{tpu_custom_call.1} parent=35 // pred_check
          %p220 = pneg %p144
        $region38: #{tpu_custom_call.1} parent=35 // pred_check_branch
          %222 = sbr.rel (%p220) target = $region40
        $region39: #{tpu_custom_call.1} parent=35 // pred_region
          %s223 = sand.u32 %s134, 1
          %s224 = scalar_lea.sflag [#allocation6], %s223
          %s225 = sand.u32 %s134, 1
          %s226 = smul.addr %s225, 16
          %s227 = scalar_lea.vmem [#allocation5], %s226
          %s229 = ssub.s32 256, 256
          %230 = vsyncadd %s224, %s229
          %s231 = smul.addr %s19, 2
          %s232 = smul.addr %s231, 128
          %s233 = scalar_lea.hbm %s5, %s232
          %s234 = sshll.u32 %s227, 4
          %s235 = int_to_ptr.vmem [resolvable:$true] %s234
          %240 = dma.hbm_to_vmem [thread:$0]  %s233, 256, %s235, %s224, 128, 128, 8
        $region40: #{tpu_custom_call.1} parent=35 // pred_fallthru
          _
      $region36: #{tpu_custom_call.1} parent=5 // pred_fallthru
        _
      %p241 = scmp.le.s32.totalorder 1, %s19
      %p242 = scmp.lt.s32.totalorder %s19, 3
      %p243 = pnand %p241, %p242
      %p244 = pneg %p243
      // Predicated region
      $region41: #{tpu_custom_call.1} parent=5 // pred_check
        _
      $region42: #{tpu_custom_call.1} parent=5 // pred_check_branch
        %246 = sbr.rel (%p243) target = $region44
      $region43: #{tpu_custom_call.1} parent=5 // pred_region
        %s247 = ssub.s32 %s19, 1
        // Predicated region
        $region45: #{tpu_custom_call.1} parent=43 // pred_check
          %p248 = pneg %p103
        $region46: #{tpu_custom_call.1} parent=43 // pred_check_branch
          %250 = sbr.rel (%p248) target = $region48
        $region47: #{tpu_custom_call.1} parent=43 // pred_region
          %251 = dma.done [#allocation3], 6144
        $region48: #{tpu_custom_call.1} parent=43 // pred_fallthru
          _
        %s252 = sand.u32 %s137, 1
        %s253 = scalar_lea.sflag [#allocation6], %s252
        %s254 = sand.u32 %s137, 1
        %s255 = smul.addr %s254, 16
        %s256 = scalar_lea.vmem [#allocation5], %s255
        // Predicated region
        $region49: #{tpu_custom_call.1} parent=43 // pred_check
          %p257 = pneg %p150
        $region50: #{tpu_custom_call.1} parent=43 // pred_check_branch
          %259 = sbr.rel (%p257) target = $region52
        $region51: #{tpu_custom_call.1} parent=43 // pred_region
          %260 = dma.done %s253, 256
        $region52: #{tpu_custom_call.1} parent=43 // pred_fallthru
          _
        %p261 = pneg %p40
        %p262 = pneg %p37
        %p263 = pneg %p61
        %p264 = pneg %p58
        %p265 = pneg %p82
        %p266 = pneg %p79
        %p267 = pneg %p103
        %p268 = pneg %p100
        %p269 = pneg %p124
        %p270 = pneg %p121
        %s271 = sand.u32 %s137, 1
        %s272 = scalar_lea.sflag [#allocation6], %s271
        %s273 = sand.u32 %s137, 1
        %s274 = smul.addr %s273, 16
        %s275 = scalar_lea.vmem [#allocation5], %s274
        %p276 = pneg %p150
        %p277 = pneg %p147
        %p278 = pneg %p176
        %p279 = pneg %p173
        %s280 = sand.u32 %s163, 1
        %s281 = scalar_lea.sflag [#allocation4], %s280
        %s282 = sand.u32 %s163, 1
        %s283 = smul.addr %s282, 32
        %s284 = scalar_lea.vmem [#allocation7], %s283
        %v285 = vld [vmem:[%s4] sm:$0x3]
        %v286 = vld [vmem:[%s0] sm:$0xff]
        %v287 = vld [vmem:[%s0 + $0x8] sm:$0xff]
        %v288 = vld [vmem:[%s0 + $0x10] sm:$0xff]
        %v289 = vld [vmem:[%s0 + $0x18] sm:$0xff]
        %v290 = vld [vmem:[%s0 + $0x20] sm:$0xff]
        %v291 = vld [vmem:[%s0 + $0x28] sm:$0xff]
        %v292 = vld [vmem:[%s0 + $0x30] sm:$0xff]
        %v293 = vld [vmem:[%s0 + $0x38] sm:$0xff]
        %v294 = vld [vmem:[%s0 + $0x40] sm:$0xff]
        %v295 = vld [vmem:[%s0 + $0x48] sm:$0xff]
        %v296 = vld [vmem:[%s0 + $0x50] sm:$0xff]
        %v297 = vld [vmem:[%s0 + $0x58] sm:$0xff]
        %v298 = vld [vmem:[%s256] sm:$0xff]
        %v299 = vld [vmem:[%s256 + $0x8] sm:$0xff]
        %vm300 = vcmask 130048
        %v302 = vsel %vm300, %v286, 0
        %v305 = vsel %vm300, %v287, 0
        %v308 = vsel %vm300, %v288, 0
        %v311 = vsel %vm300, %v289, 0
        %v314 = vsel %vm300, %v290, 0
        %v317 = vsel %vm300, %v291, 0
        %v320 = vsel %vm300, %v292, 0
        %v323 = vsel %vm300, %v293, 0
        %v326 = vsel %vm300, %v294, 0
        %v329 = vsel %vm300, %v295, 0
        %v332 = vsel %vm300, %v296, 0
        %v335 = vsel %vm300, %v297, 0
        %337 = vmatprep.subr.mxu0 0.0
        %338 = vmatpush1.msra.mxu0 0.0
        %339 = vmatprep.subr.mxu0 0.0
        %340 = vmatpush1.msra.mxu0 0.0
        %341 = vmatprep.subr.mxu0 0.0
        %342 = vmatpush1.msra.mxu0 0.0
        %343 = vmatprep.subr.mxu0 0.0
        %344 = vmatpush1.msra.mxu0 0.0
        %345 = vmatprep.subr.mxu0 0.0
        %346 = vmatpush1.msra.mxu0 0.0
        %347 = vmatprep.subr.mxu0 0.0
        %348 = vmatpush1.msra.mxu0 0.0
        %349 = vmatprep.subr.mxu0 0.0
        %350 = vmatpush1.msra.mxu0 0.0
        %351 = vmatprep.subr.mxu0 0.0
        %352 = vmatpush1.msra.mxu0 0.0
        %353 = vmatprep.subr.mxu0 0.0
        %354 = vmatpush1.msra.mxu0 0.0
        %355 = vmatprep.subr.mxu0 0.0
        %356 = vmatpush1.msra.mxu0 0.0
        %357 = vmatprep.subr.mxu0 0.0
        %358 = vmatpush1.msra.mxu0 0.0
        %359 = vmatprep.subr.mxu0 0.0
        %360 = vmatpush1.msra.mxu0 0.0
        %361 = vmatprep.subr.mxu0 0.0
        %362 = vmatpush1.msra.mxu0 0.0
        %363 = vmatprep.subr.mxu0 0.0
        %364 = vmatpush1.msra.mxu0 0.0
        %365 = vmatprep.subr.mxu0 0.0
        %366 = vmatpush1.msra.mxu0 %v299
        %367 = vmatprep.subr.mxu0 0.0
        %368 = vmatpush1.msra.mxu0 %v298
        %369 = vmatprep.subr.mxu0 0.0
        %370 = vmatpush2.msra.mxu0 0.0
        %371 = vmatprep.subr.mxu0 0.0
        %372 = vmatpush2.msra.mxu0 0.0
        %373 = vmatprep.subr.mxu0 0.0
        %374 = vmatpush2.msra.mxu0 0.0
        %375 = vmatprep.subr.mxu0 0.0
        %376 = vmatpush2.msra.mxu0 0.0
        %377 = vmatprep.subr.mxu0 0.0
        %378 = vmatpush2.msra.mxu0 0.0
        %379 = vmatprep.subr.mxu0 0.0
        %380 = vmatpush2.msra.mxu0 0.0
        %381 = vmatprep.subr.mxu0 0.0
        %382 = vmatpush2.msra.mxu0 0.0
        %383 = vmatprep.subr.mxu0 0.0
        %384 = vmatpush2.msra.mxu0 0.0
        %385 = vmatprep.subr.mxu0 0.0
        %386 = vmatpush2.msra.mxu0 0.0
        %387 = vmatprep.subr.mxu0 0.0
        %388 = vmatpush2.msra.mxu0 0.0
        %389 = vmatprep.subr.mxu0 0.0
        %390 = vmatpush2.msra.mxu0 0.0
        %391 = vmatprep.subr.mxu0 0.0
        %392 = vmatpush2.msra.mxu0 0.0
        %393 = vmatprep.subr.mxu0 0.0
        %394 = vmatpush2.msra.mxu0 0.0
        %395 = vmatprep.subr.mxu0 0.0
        %396 = vmatpush2.msra.mxu0 0.0
        %397 = vmatprep.subr.mxu0 0.0
        %398 = vmatpush2.msra.mxu0 0.0
        %399 = vmatprep.subr.mxu0 0.0
        %400 = vmatpush2.msra.mxu0 0.0
        %401 = vmatprep.mubr.f32.mxu0 0.0
        %402 = vmatmul.mubr.f32.gmra.mxu0 %v302
        %v403 = vpop.f32.mrf.mxu0
        %v404 = vadd.f32 0.0, %v403
        %v405 = vpop.f32.mrf.mxu0
        %406 = vmatprep.mubr.f32.mxu0 0.0
        %407 = vmatmul.mubr.f32.gmra.mxu0 %v305
        %v408 = vpop.f32.mrf.mxu0
        %v409 = vadd.f32 0.0, %v408
        %v410 = vpop.f32.mrf.mxu0
        %411 = vmatprep.mubr.f32.mxu0 0.0
        %412 = vmatmul.mubr.f32.gmra.mxu0 %v308
        %v413 = vpop.f32.mrf.mxu0
        %v414 = vadd.f32 0.0, %v413
        %v415 = vpop.f32.mrf.mxu0
        %416 = vmatprep.mubr.f32.mxu0 0.0
        %417 = vmatmul.mubr.f32.gmra.mxu0 %v311
        %v418 = vpop.f32.mrf.mxu0
        %v419 = vadd.f32 0.0, %v418
        %v420 = vpop.f32.mrf.mxu0
        %421 = vmatprep.mubr.f32.mxu0 0.0
        %422 = vmatmul.mubr.f32.gmra.mxu0 %v314
        %v423 = vpop.f32.mrf.mxu0
        %v424 = vadd.f32 0.0, %v423
        %v425 = vpop.f32.mrf.mxu0
        %426 = vmatprep.mubr.f32.mxu0 0.0
        %427 = vmatmul.mubr.f32.gmra.mxu0 %v317
        %v428 = vpop.f32.mrf.mxu0
        %v429 = vadd.f32 0.0, %v428
        %v430 = vpop.f32.mrf.mxu0
        %431 = vmatprep.mubr.f32.mxu0 0.0
        %432 = vmatmul.mubr.f32.gmra.mxu0 %v320
        %v433 = vpop.f32.mrf.mxu0
        %v434 = vadd.f32 0.0, %v433
        %v435 = vpop.f32.mrf.mxu0
        %436 = vmatprep.mubr.f32.mxu0 0.0
        %437 = vmatmul.mubr.f32.gmra.mxu0 %v323
        %v438 = vpop.f32.mrf.mxu0
        %v439 = vadd.f32 0.0, %v438
        %v440 = vpop.f32.mrf.mxu0
        %441 = vmatprep.mubr.f32.mxu0 0.0
        %442 = vmatmul.mubr.f32.gmra.mxu0 %v326
        %v443 = vpop.f32.mrf.mxu0
        %v444 = vadd.f32 0.0, %v443
        %v445 = vpop.f32.mrf.mxu0
        %446 = vmatprep.mubr.f32.mxu0 0.0
        %447 = vmatmul.mubr.f32.gmra.mxu0 %v329
        %v448 = vpop.f32.mrf.mxu0
        %v449 = vadd.f32 0.0, %v448
        %v450 = vpop.f32.mrf.mxu0
        %451 = vmatprep.mubr.f32.mxu0 0.0
        %452 = vmatmul.mubr.f32.gmra.mxu0 %v332
        %v453 = vpop.f32.mrf.mxu0
        %v454 = vadd.f32 0.0, %v453
        %v455 = vpop.f32.mrf.mxu0
        %456 = vmatprep.mubr.f32.mxu0 0.0
        %457 = vmatmul.mubr.f32.gmra.mxu0 %v335
        %v458 = vpop.f32.mrf.mxu0
        %v459 = vadd.f32 0.0, %v458
        %v460 = vpop.f32.mrf.mxu0
        %461 = vdwg.mxu0
        %v462 = vld [vmem:[%s1] sm:$0xff]
        %v463 = vld [vmem:[%s1 + $0x8] sm:$0xff]
        %v464 = vld [vmem:[%s1 + $0x10] sm:$0xff]
        %v465 = vld [vmem:[%s1 + $0x18] sm:$0xff]
        %v466 = vld [vmem:[%s1 + $0x20] sm:$0xff]
        %v467 = vld [vmem:[%s1 + $0x28] sm:$0xff]
        %v468 = vld [vmem:[%s1 + $0x30] sm:$0xff]
        %v469 = vld [vmem:[%s1 + $0x38] sm:$0xff]
        %s470 = scalar_lea.vmem %s1, 64
        %v471 = vld [vmem:[%s470] sm:$0xff]
        %v472 = vld [vmem:[%s470 + $0x8] sm:$0xff]
        %v473 = vld [vmem:[%s470 + $0x10] sm:$0xff]
        %v474 = vld [vmem:[%s470 + $0x18] sm:$0xff]
        %v475 = vld [vmem:[%s470 + $0x20] sm:$0xff]
        %v476 = vld [vmem:[%s470 + $0x28] sm:$0xff]
        %v477 = vld [vmem:[%s470 + $0x30] sm:$0xff]
        %v478 = vld [vmem:[%s470 + $0x38] sm:$0xff]
        %vm479 = vcmask 523264
        %v481 = vsel %vm479, %v424, 0
        %v484 = vsel %vm479, %v429, 0
        %v487 = vsel %vm479, %v434, 0
        %v490 = vsel %vm479, %v439, 0
        %492 = vmatprep.subr.mxu0 0.0
        %493 = vmatpush1.msra.mxu0 0.0
        %494 = vmatprep.subr.mxu0 0.0
        %495 = vmatpush1.msra.mxu0 0.0
        %496 = vmatprep.subr.mxu0 0.0
        %497 = vmatpush1.msra.mxu0 0.0
        %498 = vmatprep.subr.mxu0 0.0
        %499 = vmatpush1.msra.mxu0 0.0
        %500 = vmatprep.subr.mxu0 0.0
        %501 = vmatpush1.msra.mxu0 0.0
        %502 = vmatprep.subr.mxu0 0.0
        %503 = vmatpush1.msra.mxu0 0.0
        %504 = vmatprep.subr.mxu0 0.0
        %505 = vmatpush1.msra.mxu0 0.0
        %506 = vmatprep.subr.mxu0 0.0
        %507 = vmatpush1.msra.mxu0 0.0
        %508 = vmatprep.subr.mxu0 0.0
        %509 = vmatpush1.msra.mxu0 %v478
        %510 = vmatprep.subr.mxu0 0.0
        %511 = vmatpush1.msra.mxu0 %v477
        %512 = vmatprep.subr.mxu0 0.0
        %513 = vmatpush1.msra.mxu0 %v476
        %514 = vmatprep.subr.mxu0 0.0
        %515 = vmatpush1.msra.mxu0 %v475
        %516 = vmatprep.subr.mxu0 0.0
        %517 = vmatpush1.msra.mxu0 %v474
        %518 = vmatprep.subr.mxu0 0.0
        %519 = vmatpush1.msra.mxu0 %v473
        %520 = vmatprep.subr.mxu0 0.0
        %521 = vmatpush1.msra.mxu0 %v472
        %522 = vmatprep.subr.mxu0 0.0
        %523 = vmatpush1.msra.mxu0 %v471
        %524 = vmatprep.subr.mxu0 0.0
        %525 = vmatpush2.msra.mxu0 0.0
        %526 = vmatprep.subr.mxu0 0.0
        %527 = vmatpush2.msra.mxu0 0.0
        %528 = vmatprep.subr.mxu0 0.0
        %529 = vmatpush2.msra.mxu0 0.0
        %530 = vmatprep.subr.mxu0 0.0
        %531 = vmatpush2.msra.mxu0 0.0
        %532 = vmatprep.subr.mxu0 0.0
        %533 = vmatpush2.msra.mxu0 0.0
        %534 = vmatprep.subr.mxu0 0.0
        %535 = vmatpush2.msra.mxu0 0.0
        %536 = vmatprep.subr.mxu0 0.0
        %537 = vmatpush2.msra.mxu0 0.0
        %538 = vmatprep.subr.mxu0 0.0
        %539 = vmatpush2.msra.mxu0 0.0
        %540 = vmatprep.subr.mxu0 0.0
        %541 = vmatpush2.msra.mxu0 0.0
        %542 = vmatprep.subr.mxu0 0.0
        %543 = vmatpush2.msra.mxu0 0.0
        %544 = vmatprep.subr.mxu0 0.0
        %545 = vmatpush2.msra.mxu0 0.0
        %546 = vmatprep.subr.mxu0 0.0
        %547 = vmatpush2.msra.mxu0 0.0
        %548 = vmatprep.subr.mxu0 0.0
        %549 = vmatpush2.msra.mxu0 0.0
        %550 = vmatprep.subr.mxu0 0.0
        %551 = vmatpush2.msra.mxu0 0.0
        %552 = vmatprep.subr.mxu0 0.0
        %553 = vmatpush2.msra.mxu0 0.0
        %554 = vmatprep.subr.mxu0 0.0
        %555 = vmatpush2.msra.mxu0 0.0
        %556 = vmatprep.mubr.f32.mxu0 0.0
        %557 = vmatmul.mubr.f32.gmra.mxu0 %v481
        %v558 = vpop.f32.mrf.mxu0
        %v559 = vadd.f32 0.0, %v558
        %v560 = vpop.f32.mrf.mxu0
        %561 = vmatprep.mubr.f32.mxu0 0.0
        %562 = vmatmul.mubr.f32.gmra.mxu0 %v484
        %v563 = vpop.f32.mrf.mxu0
        %v564 = vadd.f32 0.0, %v563
        %v565 = vpop.f32.mrf.mxu0
        %566 = vmatprep.mubr.f32.mxu0 0.0
        %567 = vmatmul.mubr.f32.gmra.mxu0 %v487
        %v568 = vpop.f32.mrf.mxu0
        %v569 = vadd.f32 0.0, %v568
        %v570 = vpop.f32.mrf.mxu0
        %571 = vmatprep.mubr.f32.mxu0 0.0
        %572 = vmatmul.mubr.f32.gmra.mxu0 %v490
        %v573 = vpop.f32.mrf.mxu0
        %v574 = vadd.f32 0.0, %v573
        %v575 = vpop.f32.mrf.mxu0
        %576 = vdwg.mxu0
        %v578 = vsel %vm479, %v404, 0
        %v581 = vsel %vm479, %v409, 0
        %v584 = vsel %vm479, %v414, 0
        %v587 = vsel %vm479, %v419, 0
        %589 = vmatprep.subr.mxu0 0.0
        %590 = vmatpush1.msra.mxu0 0.0
        %591 = vmatprep.subr.mxu0 0.0
        %592 = vmatpush1.msra.mxu0 0.0
        %593 = vmatprep.subr.mxu0 0.0
        %594 = vmatpush1.msra.mxu0 0.0
        %595 = vmatprep.subr.mxu0 0.0
        %596 = vmatpush1.msra.mxu0 0.0
        %597 = vmatprep.subr.mxu0 0.0
        %598 = vmatpush1.msra.mxu0 0.0
        %599 = vmatprep.subr.mxu0 0.0
        %600 = vmatpush1.msra.mxu0 0.0
        %601 = vmatprep.subr.mxu0 0.0
        %602 = vmatpush1.msra.mxu0 0.0
        %603 = vmatprep.subr.mxu0 0.0
        %604 = vmatpush1.msra.mxu0 0.0
        %605 = vmatprep.subr.mxu0 0.0
        %606 = vmatpush1.msra.mxu0 %v469
        %607 = vmatprep.subr.mxu0 0.0
        %608 = vmatpush1.msra.mxu0 %v468
        %609 = vmatprep.subr.mxu0 0.0
        %610 = vmatpush1.msra.mxu0 %v467
        %611 = vmatprep.subr.mxu0 0.0
        %612 = vmatpush1.msra.mxu0 %v466
        %613 = vmatprep.subr.mxu0 0.0
        %614 = vmatpush1.msra.mxu0 %v465
        %615 = vmatprep.subr.mxu0 0.0
        %616 = vmatpush1.msra.mxu0 %v464
        %617 = vmatprep.subr.mxu0 0.0
        %618 = vmatpush1.msra.mxu0 %v463
        %619 = vmatprep.subr.mxu0 0.0
        %620 = vmatpush1.msra.mxu0 %v462
        %621 = vmatprep.subr.mxu0 0.0
        %622 = vmatpush2.msra.mxu0 0.0
        %623 = vmatprep.subr.mxu0 0.0
        %624 = vmatpush2.msra.mxu0 0.0
        %625 = vmatprep.subr.mxu0 0.0
        %626 = vmatpush2.msra.mxu0 0.0
        %627 = vmatprep.subr.mxu0 0.0
        %628 = vmatpush2.msra.mxu0 0.0
        %629 = vmatprep.subr.mxu0 0.0
        %630 = vmatpush2.msra.mxu0 0.0
        %631 = vmatprep.subr.mxu0 0.0
        %632 = vmatpush2.msra.mxu0 0.0
        %633 = vmatprep.subr.mxu0 0.0
        %634 = vmatpush2.msra.mxu0 0.0
        %635 = vmatprep.subr.mxu0 0.0
        %636 = vmatpush2.msra.mxu0 0.0
        %637 = vmatprep.subr.mxu0 0.0
        %638 = vmatpush2.msra.mxu0 0.0
        %639 = vmatprep.subr.mxu0 0.0
        %640 = vmatpush2.msra.mxu0 0.0
        %641 = vmatprep.subr.mxu0 0.0
        %642 = vmatpush2.msra.mxu0 0.0
        %643 = vmatprep.subr.mxu0 0.0
        %644 = vmatpush2.msra.mxu0 0.0
        %645 = vmatprep.subr.mxu0 0.0
        %646 = vmatpush2.msra.mxu0 0.0
        %647 = vmatprep.subr.mxu0 0.0
        %648 = vmatpush2.msra.mxu0 0.0
        %649 = vmatprep.subr.mxu0 0.0
        %650 = vmatpush2.msra.mxu0 0.0
        %651 = vmatprep.subr.mxu0 0.0
        %652 = vmatpush2.msra.mxu0 0.0
        %653 = vmatprep.mubr.f32.mxu0 0.0
        %654 = vmatmul.mubr.f32.gmra.mxu0 %v578
        %v655 = vpop.f32.mrf.mxu0
        %v656 = vadd.f32 %v559, %v655
        %v657 = vpop.f32.mrf.mxu0
        %658 = vmatprep.mubr.f32.mxu0 0.0
        %659 = vmatmul.mubr.f32.gmra.mxu0 %v581
        %v660 = vpop.f32.mrf.mxu0
        %v661 = vadd.f32 %v564, %v660
        %v662 = vpop.f32.mrf.mxu0
        %663 = vmatprep.mubr.f32.mxu0 0.0
        %664 = vmatmul.mubr.f32.gmra.mxu0 %v584
        %v665 = vpop.f32.mrf.mxu0
        %v666 = vadd.f32 %v569, %v665
        %v667 = vpop.f32.mrf.mxu0
        %668 = vmatprep.mubr.f32.mxu0 0.0
        %669 = vmatmul.mubr.f32.gmra.mxu0 %v587
        %v670 = vpop.f32.mrf.mxu0
        %v671 = vadd.f32 %v574, %v670
        %v672 = vpop.f32.mrf.mxu0
        %673 = vdwg.mxu0
        %s674 = scalar_lea.vmem %s1, 128
        %v675 = vld [vmem:[%s674] sm:$0xff]
        %v676 = vld [vmem:[%s674 + $0x8] sm:$0xff]
        %v677 = vld [vmem:[%s674 + $0x10] sm:$0xff]
        %v678 = vld [vmem:[%s674 + $0x18] sm:$0xff]
        %v679 = vld [vmem:[%s674 + $0x20] sm:$0xff]
        %v680 = vld [vmem:[%s674 + $0x28] sm:$0xff]
        %v681 = vld [vmem:[%s674 + $0x30] sm:$0xff]
        %v682 = vld [vmem:[%s674 + $0x38] sm:$0xff]
        %v684 = vsel %vm479, %v444, 0
        %v687 = vsel %vm479, %v449, 0
        %v690 = vsel %vm479, %v454, 0
        %v693 = vsel %vm479, %v459, 0
        %695 = vmatprep.subr.mxu0 0.0
        %696 = vmatpush1.msra.mxu0 0.0
        %697 = vmatprep.subr.mxu0 0.0
        %698 = vmatpush1.msra.mxu0 0.0
        %699 = vmatprep.subr.mxu0 0.0
        %700 = vmatpush1.msra.mxu0 0.0
        %701 = vmatprep.subr.mxu0 0.0
        %702 = vmatpush1.msra.mxu0 0.0
        %703 = vmatprep.subr.mxu0 0.0
        %704 = vmatpush1.msra.mxu0 0.0
        %705 = vmatprep.subr.mxu0 0.0
        %706 = vmatpush1.msra.mxu0 0.0
        %707 = vmatprep.subr.mxu0 0.0
        %708 = vmatpush1.msra.mxu0 0.0
        %709 = vmatprep.subr.mxu0 0.0
        %710 = vmatpush1.msra.mxu0 0.0
        %711 = vmatprep.subr.mxu0 0.0
        %712 = vmatpush1.msra.mxu0 %v682
        %713 = vmatprep.subr.mxu0 0.0
        %714 = vmatpush1.msra.mxu0 %v681
        %715 = vmatprep.subr.mxu0 0.0
        %716 = vmatpush1.msra.mxu0 %v680
        %717 = vmatprep.subr.mxu0 0.0
        %718 = vmatpush1.msra.mxu0 %v679
        %719 = vmatprep.subr.mxu0 0.0
        %720 = vmatpush1.msra.mxu0 %v678
        %721 = vmatprep.subr.mxu0 0.0
        %722 = vmatpush1.msra.mxu0 %v677
        %723 = vmatprep.subr.mxu0 0.0
        %724 = vmatpush1.msra.mxu0 %v676
        %725 = vmatprep.subr.mxu0 0.0
        %726 = vmatpush1.msra.mxu0 %v675
        %727 = vmatprep.subr.mxu0 0.0
        %728 = vmatpush2.msra.mxu0 0.0
        %729 = vmatprep.subr.mxu0 0.0
        %730 = vmatpush2.msra.mxu0 0.0
        %731 = vmatprep.subr.mxu0 0.0
        %732 = vmatpush2.msra.mxu0 0.0
        %733 = vmatprep.subr.mxu0 0.0
        %734 = vmatpush2.msra.mxu0 0.0
        %735 = vmatprep.subr.mxu0 0.0
        %736 = vmatpush2.msra.mxu0 0.0
        %737 = vmatprep.subr.mxu0 0.0
        %738 = vmatpush2.msra.mxu0 0.0
        %739 = vmatprep.subr.mxu0 0.0
        %740 = vmatpush2.msra.mxu0 0.0
        %741 = vmatprep.subr.mxu0 0.0
        %742 = vmatpush2.msra.mxu0 0.0
        %743 = vmatprep.subr.mxu0 0.0
        %744 = vmatpush2.msra.mxu0 0.0
        %745 = vmatprep.subr.mxu0 0.0
        %746 = vmatpush2.msra.mxu0 0.0
        %747 = vmatprep.subr.mxu0 0.0
        %748 = vmatpush2.msra.mxu0 0.0
        %749 = vmatprep.subr.mxu0 0.0
        %750 = vmatpush2.msra.mxu0 0.0
        %751 = vmatprep.subr.mxu0 0.0
        %752 = vmatpush2.msra.mxu0 0.0
        %753 = vmatprep.subr.mxu0 0.0
        %754 = vmatpush2.msra.mxu0 0.0
        %755 = vmatprep.subr.mxu0 0.0
        %756 = vmatpush2.msra.mxu0 0.0
        %757 = vmatprep.subr.mxu0 0.0
        %758 = vmatpush2.msra.mxu0 0.0
        %759 = vmatprep.mubr.f32.mxu0 0.0
        %760 = vmatmul.mubr.f32.gmra.mxu0 %v684
        %v761 = vpop.f32.mrf.mxu0
        %v762 = vadd.f32 0.0, %v761
        %v763 = vpop.f32.mrf.mxu0
        %764 = vmatprep.mubr.f32.mxu0 0.0
        %765 = vmatmul.mubr.f32.gmra.mxu0 %v687
        %v766 = vpop.f32.mrf.mxu0
        %v767 = vadd.f32 0.0, %v766
        %v768 = vpop.f32.mrf.mxu0
        %769 = vmatprep.mubr.f32.mxu0 0.0
        %770 = vmatmul.mubr.f32.gmra.mxu0 %v690
        %v771 = vpop.f32.mrf.mxu0
        %v772 = vadd.f32 0.0, %v771
        %v773 = vpop.f32.mrf.mxu0
        %774 = vmatprep.mubr.f32.mxu0 0.0
        %775 = vmatmul.mubr.f32.gmra.mxu0 %v693
        %v776 = vpop.f32.mrf.mxu0
        %v777 = vadd.f32 0.0, %v776
        %v778 = vpop.f32.mrf.mxu0
        %779 = vdwg.mxu0
        %v780 = vadd.f32 %v656, %v762
        %v781 = vadd.f32 %v661, %v767
        %v782 = vadd.f32 %v666, %v772
        %v783 = vadd.f32 %v671, %v777
        %v784 = vlaneseq
        %v785 = vshrl.u32 %v784, 7
        %v786 = vsub.s32 0, %v785
        %v787 = vrot.slane %v285, %v786
        %v788 = vadd.f32 %v780, %v787
        %v789 = vadd.f32 %v781, %v787
        %v790 = vadd.f32 %v782, %v787
        %v791 = vadd.f32 %v783, %v787
        %v792 = vmax.f32 %v788, 0.0
        %v793 = vmax.f32 %v789, 0.0
        %v794 = vmax.f32 %v790, 0.0
        %v795 = vmax.f32 %v791, 0.0
        %v796 = vld [vmem:[%s2] sm:$0xff]
        %v797 = vld [vmem:[%s2 + $0x8] sm:$0xff]
        %v798 = vld [vmem:[%s2 + $0x10] sm:$0xff]
        %v799 = vld [vmem:[%s2 + $0x18] sm:$0xff]
        %v800 = vld [vmem:[%s2 + $0x20] sm:$0xff]
        %v801 = vld [vmem:[%s2 + $0x28] sm:$0xff]
        %v802 = vld [vmem:[%s2 + $0x30] sm:$0xff]
        %v803 = vld [vmem:[%s2 + $0x38] sm:$0xff]
        %v804 = vld [vmem:[%s2 + $0x40] sm:$0xff]
        %v805 = vld [vmem:[%s2 + $0x48] sm:$0xff]
        %v806 = vld [vmem:[%s2 + $0x50] sm:$0xff]
        %v807 = vld [vmem:[%s2 + $0x58] sm:$0xff]
        %vm808 = vcmask 261120
        %v810 = vsel %vm808, %v796, 0
        %v813 = vsel %vm808, %v797, 0
        %v816 = vsel %vm808, %v798, 0
        %v819 = vsel %vm808, %v799, 0
        %v822 = vsel %vm808, %v800, 0
        %v825 = vsel %vm808, %v801, 0
        %v828 = vsel %vm808, %v802, 0
        %v831 = vsel %vm808, %v803, 0
        %v834 = vsel %vm808, %v804, 0
        %v837 = vsel %vm808, %v805, 0
        %v840 = vsel %vm808, %v806, 0
        %v843 = vsel %vm808, %v807, 0
        %845 = vmatprep.subr.mxu0 0.0
        %846 = vmatpush1.msra.mxu0 0.0
        %847 = vmatprep.subr.mxu0 0.0
        %848 = vmatpush1.msra.mxu0 0.0
        %849 = vmatprep.subr.mxu0 0.0
        %850 = vmatpush1.msra.mxu0 0.0
        %851 = vmatprep.subr.mxu0 0.0
        %852 = vmatpush1.msra.mxu0 0.0
        %853 = vmatprep.subr.mxu0 0.0
        %854 = vmatpush1.msra.mxu0 0.0
        %855 = vmatprep.subr.mxu0 0.0
        %856 = vmatpush1.msra.mxu0 0.0
        %857 = vmatprep.subr.mxu0 0.0
        %858 = vmatpush1.msra.mxu0 0.0
        %859 = vmatprep.subr.mxu0 0.0
        %860 = vmatpush1.msra.mxu0 0.0
        %861 = vmatprep.subr.mxu0 0.0
        %862 = vmatpush1.msra.mxu0 0.0
        %863 = vmatprep.subr.mxu0 0.0
        %864 = vmatpush1.msra.mxu0 0.0
        %865 = vmatprep.subr.mxu0 0.0
        %866 = vmatpush1.msra.mxu0 0.0
        %867 = vmatprep.subr.mxu0 0.0
        %868 = vmatpush1.msra.mxu0 0.0
        %869 = vmatprep.subr.mxu0 0.0
        %870 = vmatpush1.msra.mxu0 %v795
        %871 = vmatprep.subr.mxu0 0.0
        %872 = vmatpush1.msra.mxu0 %v794
        %873 = vmatprep.subr.mxu0 0.0
        %874 = vmatpush1.msra.mxu0 %v793
        %875 = vmatprep.subr.mxu0 0.0
        %876 = vmatpush1.msra.mxu0 %v792
        %877 = vmatprep.subr.mxu0 0.0
        %878 = vmatpush2.msra.mxu0 0.0
        %879 = vmatprep.subr.mxu0 0.0
        %880 = vmatpush2.msra.mxu0 0.0
        %881 = vmatprep.subr.mxu0 0.0
        %882 = vmatpush2.msra.mxu0 0.0
        %883 = vmatprep.subr.mxu0 0.0
        %884 = vmatpush2.msra.mxu0 0.0
        %885 = vmatprep.subr.mxu0 0.0
        %886 = vmatpush2.msra.mxu0 0.0
        %887 = vmatprep.subr.mxu0 0.0
        %888 = vmatpush2.msra.mxu0 0.0
        %889 = vmatprep.subr.mxu0 0.0
        %890 = vmatpush2.msra.mxu0 0.0
        %891 = vmatprep.subr.mxu0 0.0
        %892 = vmatpush2.msra.mxu0 0.0
        %893 = vmatprep.subr.mxu0 0.0
        %894 = vmatpush2.msra.mxu0 0.0
        %895 = vmatprep.subr.mxu0 0.0
        %896 = vmatpush2.msra.mxu0 0.0
        %897 = vmatprep.subr.mxu0 0.0
        %898 = vmatpush2.msra.mxu0 0.0
        %899 = vmatprep.subr.mxu0 0.0
        %900 = vmatpush2.msra.mxu0 0.0
        %901 = vmatprep.subr.mxu0 0.0
        %902 = vmatpush2.msra.mxu0 0.0
        %903 = vmatprep.subr.mxu0 0.0
        %904 = vmatpush2.msra.mxu0 0.0
        %905 = vmatprep.subr.mxu0 0.0
        %906 = vmatpush2.msra.mxu0 0.0
        %907 = vmatprep.subr.mxu0 0.0
        %908 = vmatpush2.msra.mxu0 0.0
        %909 = vmatprep.mubr.f32.mxu0 0.0
        %910 = vmatmul.mubr.f32.gmra.mxu0 %v810
        %v911 = vpop.f32.mrf.mxu0
        %v912 = vadd.f32 0.0, %v911
        %v913 = vpop.f32.mrf.mxu0
        %914 = vmatprep.mubr.f32.mxu0 0.0
        %915 = vmatmul.mubr.f32.gmra.mxu0 %v813
        %v916 = vpop.f32.mrf.mxu0
        %v917 = vadd.f32 0.0, %v916
        %v918 = vpop.f32.mrf.mxu0
        %919 = vmatprep.mubr.f32.mxu0 0.0
        %920 = vmatmul.mubr.f32.gmra.mxu0 %v816
        %v921 = vpop.f32.mrf.mxu0
        %v922 = vadd.f32 0.0, %v921
        %v923 = vpop.f32.mrf.mxu0
        %924 = vmatprep.mubr.f32.mxu0 0.0
        %925 = vmatmul.mubr.f32.gmra.mxu0 %v819
        %v926 = vpop.f32.mrf.mxu0
        %v927 = vadd.f32 0.0, %v926
        %v928 = vpop.f32.mrf.mxu0
        %929 = vmatprep.mubr.f32.mxu0 0.0
        %930 = vmatmul.mubr.f32.gmra.mxu0 %v822
        %v931 = vpop.f32.mrf.mxu0
        %v932 = vadd.f32 0.0, %v931
        %v933 = vpop.f32.mrf.mxu0
        %934 = vmatprep.mubr.f32.mxu0 0.0
        %935 = vmatmul.mubr.f32.gmra.mxu0 %v825
        %v936 = vpop.f32.mrf.mxu0
        %v937 = vadd.f32 0.0, %v936
        %v938 = vpop.f32.mrf.mxu0
        %939 = vmatprep.mubr.f32.mxu0 0.0
        %940 = vmatmul.mubr.f32.gmra.mxu0 %v828
        %v941 = vpop.f32.mrf.mxu0
        %v942 = vadd.f32 0.0, %v941
        %v943 = vpop.f32.mrf.mxu0
        %944 = vmatprep.mubr.f32.mxu0 0.0
        %945 = vmatmul.mubr.f32.gmra.mxu0 %v831
        %v946 = vpop.f32.mrf.mxu0
        %v947 = vadd.f32 0.0, %v946
        %v948 = vpop.f32.mrf.mxu0
        %949 = vmatprep.mubr.f32.mxu0 0.0
        %950 = vmatmul.mubr.f32.gmra.mxu0 %v834
        %v951 = vpop.f32.mrf.mxu0
        %v952 = vadd.f32 0.0, %v951
        %v953 = vpop.f32.mrf.mxu0
        %954 = vmatprep.mubr.f32.mxu0 0.0
        %955 = vmatmul.mubr.f32.gmra.mxu0 %v837
        %v956 = vpop.f32.mrf.mxu0
        %v957 = vadd.f32 0.0, %v956
        %v958 = vpop.f32.mrf.mxu0
        %959 = vmatprep.mubr.f32.mxu0 0.0
        %960 = vmatmul.mubr.f32.gmra.mxu0 %v840
        %v961 = vpop.f32.mrf.mxu0
        %v962 = vadd.f32 0.0, %v961
        %v963 = vpop.f32.mrf.mxu0
        %964 = vmatprep.mubr.f32.mxu0 0.0
        %965 = vmatmul.mubr.f32.gmra.mxu0 %v843
        %v966 = vpop.f32.mrf.mxu0
        %v967 = vadd.f32 0.0, %v966
        %v968 = vpop.f32.mrf.mxu0
        %969 = vdwg.mxu0
        %v970 = vld [vmem:[#allocation2] sm:$0xff]
        %v971 = vld [vmem:[#allocation2 + $0x8] sm:$0xff]
        %v972 = vld [vmem:[#allocation2 + $0x10] sm:$0xff]
        %v973 = vld [vmem:[#allocation2 + $0x18] sm:$0xff]
        %v974 = vld [vmem:[#allocation2 + $0x20] sm:$0xff]
        %v975 = vld [vmem:[#allocation2 + $0x28] sm:$0xff]
        %v976 = vld [vmem:[#allocation2 + $0x30] sm:$0xff]
        %v977 = vld [vmem:[#allocation2 + $0x38] sm:$0xff]
        %v978 = vld [vmem:[#allocation2 + $0x40] sm:$0xff]
        %v979 = vld [vmem:[#allocation2 + $0x48] sm:$0xff]
        %v980 = vld [vmem:[#allocation2 + $0x50] sm:$0xff]
        %v981 = vld [vmem:[#allocation2 + $0x58] sm:$0xff]
        %v982 = vld [vmem:[#allocation2 + $0x60] sm:$0xff]
        %v983 = vld [vmem:[#allocation2 + $0x68] sm:$0xff]
        %v984 = vld [vmem:[#allocation2 + $0x70] sm:$0xff]
        %v985 = vld [vmem:[#allocation2 + $0x78] sm:$0xff]
        %s986 = scalar_lea.vmem [#allocation2], 128
        %v987 = vld [vmem:[%s986] sm:$0xff]
        %v988 = vld [vmem:[%s986 + $0x8] sm:$0xff]
        %v989 = vld [vmem:[%s986 + $0x10] sm:$0xff]
        %v990 = vld [vmem:[%s986 + $0x18] sm:$0xff]
        %v991 = vld [vmem:[%s986 + $0x20] sm:$0xff]
        %v992 = vld [vmem:[%s986 + $0x28] sm:$0xff]
        %v993 = vld [vmem:[%s986 + $0x30] sm:$0xff]
        %v994 = vld [vmem:[%s986 + $0x38] sm:$0xff]
        %v995 = vld [vmem:[%s986 + $0x40] sm:$0xff]
        %v996 = vld [vmem:[%s986 + $0x48] sm:$0xff]
        %v997 = vld [vmem:[%s986 + $0x50] sm:$0xff]
        %v998 = vld [vmem:[%s986 + $0x58] sm:$0xff]
        %v999 = vld [vmem:[%s986 + $0x60] sm:$0xff]
        %v1000 = vld [vmem:[%s986 + $0x68] sm:$0xff]
        %v1001 = vld [vmem:[%s986 + $0x70] sm:$0xff]
        %v1002 = vld [vmem:[%s986 + $0x78] sm:$0xff]
        %1003 = vmatprep.subr.mxu0 0.0
        %1004 = vmatpush1.msra.mxu0 %v1002
        %1005 = vmatprep.subr.mxu0 0.0
        %1006 = vmatpush1.msra.mxu0 %v1001
        %1007 = vmatprep.subr.mxu0 0.0
        %1008 = vmatpush1.msra.mxu0 %v1000
        %1009 = vmatprep.subr.mxu0 0.0
        %1010 = vmatpush1.msra.mxu0 %v999
        %1011 = vmatprep.subr.mxu0 0.0
        %1012 = vmatpush1.msra.mxu0 %v998
        %1013 = vmatprep.subr.mxu0 0.0
        %1014 = vmatpush1.msra.mxu0 %v997
        %1015 = vmatprep.subr.mxu0 0.0
        %1016 = vmatpush1.msra.mxu0 %v996
        %1017 = vmatprep.subr.mxu0 0.0
        %1018 = vmatpush1.msra.mxu0 %v995
        %1019 = vmatprep.subr.mxu0 0.0
        %1020 = vmatpush1.msra.mxu0 %v994
        %1021 = vmatprep.subr.mxu0 0.0
        %1022 = vmatpush1.msra.mxu0 %v993
        %1023 = vmatprep.subr.mxu0 0.0
        %1024 = vmatpush1.msra.mxu0 %v992
        %1025 = vmatprep.subr.mxu0 0.0
        %1026 = vmatpush1.msra.mxu0 %v991
        %1027 = vmatprep.subr.mxu0 0.0
        %1028 = vmatpush1.msra.mxu0 %v990
        %1029 = vmatprep.subr.mxu0 0.0
        %1030 = vmatpush1.msra.mxu0 %v989
        %1031 = vmatprep.subr.mxu0 0.0
        %1032 = vmatpush1.msra.mxu0 %v988
        %1033 = vmatprep.subr.mxu0 0.0
        %1034 = vmatpush1.msra.mxu0 %v987
        %1035 = vmatprep.subr.mxu0 0.0
        %1036 = vmatpush2.msra.mxu0 0.0
        %1037 = vmatprep.subr.mxu0 0.0
        %1038 = vmatpush2.msra.mxu0 0.0
        %1039 = vmatprep.subr.mxu0 0.0
        %1040 = vmatpush2.msra.mxu0 0.0
        %1041 = vmatprep.subr.mxu0 0.0
        %1042 = vmatpush2.msra.mxu0 0.0
        %1043 = vmatprep.subr.mxu0 0.0
        %1044 = vmatpush2.msra.mxu0 0.0
        %1045 = vmatprep.subr.mxu0 0.0
        %1046 = vmatpush2.msra.mxu0 0.0
        %1047 = vmatprep.subr.mxu0 0.0
        %1048 = vmatpush2.msra.mxu0 0.0
        %1049 = vmatprep.subr.mxu0 0.0
        %1050 = vmatpush2.msra.mxu0 0.0
        %1051 = vmatprep.subr.mxu0 0.0
        %1052 = vmatpush2.msra.mxu0 0.0
        %1053 = vmatprep.subr.mxu0 0.0
        %1054 = vmatpush2.msra.mxu0 0.0
        %1055 = vmatprep.subr.mxu0 0.0
        %1056 = vmatpush2.msra.mxu0 0.0
        %1057 = vmatprep.subr.mxu0 0.0
        %1058 = vmatpush2.msra.mxu0 0.0
        %1059 = vmatprep.subr.mxu0 0.0
        %1060 = vmatpush2.msra.mxu0 0.0
        %1061 = vmatprep.subr.mxu0 0.0
        %1062 = vmatpush2.msra.mxu0 0.0
        %1063 = vmatprep.subr.mxu0 0.0
        %1064 = vmatpush2.msra.mxu0 0.0
        %1065 = vmatprep.subr.mxu0 0.0
        %1066 = vmatpush2.msra.mxu0 0.0
        %1067 = vmatprep.mubr.f32.mxu0 0.0
        %1068 = vmatmul.mubr.f32.gmra.mxu0 %v932
        %v1069 = vpop.f32.mrf.mxu0
        %v1070 = vadd.f32 0.0, %v1069
        %v1071 = vpop.f32.mrf.mxu0
        %1072 = vmatprep.mubr.f32.mxu0 0.0
        %1073 = vmatmul.mubr.f32.gmra.mxu0 %v937
        %v1074 = vpop.f32.mrf.mxu0
        %v1075 = vadd.f32 0.0, %v1074
        %v1076 = vpop.f32.mrf.mxu0
        %1077 = vmatprep.mubr.f32.mxu0 0.0
        %1078 = vmatmul.mubr.f32.gmra.mxu0 %v942
        %v1079 = vpop.f32.mrf.mxu0
        %v1080 = vadd.f32 0.0, %v1079
        %v1081 = vpop.f32.mrf.mxu0
        %1082 = vmatprep.mubr.f32.mxu0 0.0
        %1083 = vmatmul.mubr.f32.gmra.mxu0 %v947
        %v1084 = vpop.f32.mrf.mxu0
        %v1085 = vadd.f32 0.0, %v1084
        %v1086 = vpop.f32.mrf.mxu0
        %1087 = vdwg.mxu0
        %1088 = vmatprep.subr.mxu0 0.0
        %1089 = vmatpush1.msra.mxu0 %v985
        %1090 = vmatprep.subr.mxu0 0.0
        %1091 = vmatpush1.msra.mxu0 %v984
        %1092 = vmatprep.subr.mxu0 0.0
        %1093 = vmatpush1.msra.mxu0 %v983
        %1094 = vmatprep.subr.mxu0 0.0
        %1095 = vmatpush1.msra.mxu0 %v982
        %1096 = vmatprep.subr.mxu0 0.0
        %1097 = vmatpush1.msra.mxu0 %v981
        %1098 = vmatprep.subr.mxu0 0.0
        %1099 = vmatpush1.msra.mxu0 %v980
        %1100 = vmatprep.subr.mxu0 0.0
        %1101 = vmatpush1.msra.mxu0 %v979
        %1102 = vmatprep.subr.mxu0 0.0
        %1103 = vmatpush1.msra.mxu0 %v978
        %1104 = vmatprep.subr.mxu0 0.0
        %1105 = vmatpush1.msra.mxu0 %v977
        %1106 = vmatprep.subr.mxu0 0.0
        %1107 = vmatpush1.msra.mxu0 %v976
        %1108 = vmatprep.subr.mxu0 0.0
        %1109 = vmatpush1.msra.mxu0 %v975
        %1110 = vmatprep.subr.mxu0 0.0
        %1111 = vmatpush1.msra.mxu0 %v974
        %1112 = vmatprep.subr.mxu0 0.0
        %1113 = vmatpush1.msra.mxu0 %v973
        %1114 = vmatprep.subr.mxu0 0.0
        %1115 = vmatpush1.msra.mxu0 %v972
        %1116 = vmatprep.subr.mxu0 0.0
        %1117 = vmatpush1.msra.mxu0 %v971
        %1118 = vmatprep.subr.mxu0 0.0
        %1119 = vmatpush1.msra.mxu0 %v970
        %1120 = vmatprep.subr.mxu0 0.0
        %1121 = vmatpush2.msra.mxu0 0.0
        %1122 = vmatprep.subr.mxu0 0.0
        %1123 = vmatpush2.msra.mxu0 0.0
        %1124 = vmatprep.subr.mxu0 0.0
        %1125 = vmatpush2.msra.mxu0 0.0
        %1126 = vmatprep.subr.mxu0 0.0
        %1127 = vmatpush2.msra.mxu0 0.0
        %1128 = vmatprep.subr.mxu0 0.0
        %1129 = vmatpush2.msra.mxu0 0.0
        %1130 = vmatprep.subr.mxu0 0.0
        %1131 = vmatpush2.msra.mxu0 0.0
        %1132 = vmatprep.subr.mxu0 0.0
        %1133 = vmatpush2.msra.mxu0 0.0
        %1134 = vmatprep.subr.mxu0 0.0
        %1135 = vmatpush2.msra.mxu0 0.0
        %1136 = vmatprep.subr.mxu0 0.0
        %1137 = vmatpush2.msra.mxu0 0.0
        %1138 = vmatprep.subr.mxu0 0.0
        %1139 = vmatpush2.msra.mxu0 0.0
        %1140 = vmatprep.subr.mxu0 0.0
        %1141 = vmatpush2.msra.mxu0 0.0
        %1142 = vmatprep.subr.mxu0 0.0
        %1143 = vmatpush2.msra.mxu0 0.0
        %1144 = vmatprep.subr.mxu0 0.0
        %1145 = vmatpush2.msra.mxu0 0.0
        %1146 = vmatprep.subr.mxu0 0.0
        %1147 = vmatpush2.msra.mxu0 0.0
        %1148 = vmatprep.subr.mxu0 0.0
        %1149 = vmatpush2.msra.mxu0 0.0
        %1150 = vmatprep.subr.mxu0 0.0
        %1151 = vmatpush2.msra.mxu0 0.0
        %1152 = vmatprep.mubr.f32.mxu0 0.0
        %1153 = vmatmul.mubr.f32.gmra.mxu0 %v912
        %v1154 = vpop.f32.mrf.mxu0
        %v1155 = vadd.f32 %v1070, %v1154
        %v1156 = vpop.f32.mrf.mxu0
        %1157 = vmatprep.mubr.f32.mxu0 0.0
        %1158 = vmatmul.mubr.f32.gmra.mxu0 %v917
        %v1159 = vpop.f32.mrf.mxu0
        %v1160 = vadd.f32 %v1075, %v1159
        %v1161 = vpop.f32.mrf.mxu0
        %1162 = vmatprep.mubr.f32.mxu0 0.0
        %1163 = vmatmul.mubr.f32.gmra.mxu0 %v922
        %v1164 = vpop.f32.mrf.mxu0
        %v1165 = vadd.f32 %v1080, %v1164
        %v1166 = vpop.f32.mrf.mxu0
        %1167 = vmatprep.mubr.f32.mxu0 0.0
        %1168 = vmatmul.mubr.f32.gmra.mxu0 %v927
        %v1169 = vpop.f32.mrf.mxu0
        %v1170 = vadd.f32 %v1085, %v1169
        %v1171 = vpop.f32.mrf.mxu0
        %1172 = vdwg.mxu0
        %s1173 = scalar_lea.vmem [#allocation2], 256
        %v1174 = vld [vmem:[%s1173] sm:$0xff]
        %v1175 = vld [vmem:[%s1173 + $0x8] sm:$0xff]
        %v1176 = vld [vmem:[%s1173 + $0x10] sm:$0xff]
        %v1177 = vld [vmem:[%s1173 + $0x18] sm:$0xff]
        %v1178 = vld [vmem:[%s1173 + $0x20] sm:$0xff]
        %v1179 = vld [vmem:[%s1173 + $0x28] sm:$0xff]
        %v1180 = vld [vmem:[%s1173 + $0x30] sm:$0xff]
        %v1181 = vld [vmem:[%s1173 + $0x38] sm:$0xff]
        %v1182 = vld [vmem:[%s1173 + $0x40] sm:$0xff]
        %v1183 = vld [vmem:[%s1173 + $0x48] sm:$0xff]
        %v1184 = vld [vmem:[%s1173 + $0x50] sm:$0xff]
        %v1185 = vld [vmem:[%s1173 + $0x58] sm:$0xff]
        %v1186 = vld [vmem:[%s1173 + $0x60] sm:$0xff]
        %v1187 = vld [vmem:[%s1173 + $0x68] sm:$0xff]
        %v1188 = vld [vmem:[%s1173 + $0x70] sm:$0xff]
        %v1189 = vld [vmem:[%s1173 + $0x78] sm:$0xff]
        %1190 = vmatprep.subr.mxu0 0.0
        %1191 = vmatpush1.msra.mxu0 %v1189
        %1192 = vmatprep.subr.mxu0 0.0
        %1193 = vmatpush1.msra.mxu0 %v1188
        %1194 = vmatprep.subr.mxu0 0.0
        %1195 = vmatpush1.msra.mxu0 %v1187
        %1196 = vmatprep.subr.mxu0 0.0
        %1197 = vmatpush1.msra.mxu0 %v1186
        %1198 = vmatprep.subr.mxu0 0.0
        %1199 = vmatpush1.msra.mxu0 %v1185
        %1200 = vmatprep.subr.mxu0 0.0
        %1201 = vmatpush1.msra.mxu0 %v1184
        %1202 = vmatprep.subr.mxu0 0.0
        %1203 = vmatpush1.msra.mxu0 %v1183
        %1204 = vmatprep.subr.mxu0 0.0
        %1205 = vmatpush1.msra.mxu0 %v1182
        %1206 = vmatprep.subr.mxu0 0.0
        %1207 = vmatpush1.msra.mxu0 %v1181
        %1208 = vmatprep.subr.mxu0 0.0
        %1209 = vmatpush1.msra.mxu0 %v1180
        %1210 = vmatprep.subr.mxu0 0.0
        %1211 = vmatpush1.msra.mxu0 %v1179
        %1212 = vmatprep.subr.mxu0 0.0
        %1213 = vmatpush1.msra.mxu0 %v1178
        %1214 = vmatprep.subr.mxu0 0.0
        %1215 = vmatpush1.msra.mxu0 %v1177
        %1216 = vmatprep.subr.mxu0 0.0
        %1217 = vmatpush1.msra.mxu0 %v1176
        %1218 = vmatprep.subr.mxu0 0.0
        %1219 = vmatpush1.msra.mxu0 %v1175
        %1220 = vmatprep.subr.mxu0 0.0
        %1221 = vmatpush1.msra.mxu0 %v1174
        %1222 = vmatprep.subr.mxu0 0.0
        %1223 = vmatpush2.msra.mxu0 0.0
        %1224 = vmatprep.subr.mxu0 0.0
        %1225 = vmatpush2.msra.mxu0 0.0
        %1226 = vmatprep.subr.mxu0 0.0
        %1227 = vmatpush2.msra.mxu0 0.0
        %1228 = vmatprep.subr.mxu0 0.0
        %1229 = vmatpush2.msra.mxu0 0.0
        %1230 = vmatprep.subr.mxu0 0.0
        %1231 = vmatpush2.msra.mxu0 0.0
        %1232 = vmatprep.subr.mxu0 0.0
        %1233 = vmatpush2.msra.mxu0 0.0
        %1234 = vmatprep.subr.mxu0 0.0
        %1235 = vmatpush2.msra.mxu0 0.0
        %1236 = vmatprep.subr.mxu0 0.0
        %1237 = vmatpush2.msra.mxu0 0.0
        %1238 = vmatprep.subr.mxu0 0.0
        %1239 = vmatpush2.msra.mxu0 0.0
        %1240 = vmatprep.subr.mxu0 0.0
        %1241 = vmatpush2.msra.mxu0 0.0
        %1242 = vmatprep.subr.mxu0 0.0
        %1243 = vmatpush2.msra.mxu0 0.0
        %1244 = vmatprep.subr.mxu0 0.0
        %1245 = vmatpush2.msra.mxu0 0.0
        %1246 = vmatprep.subr.mxu0 0.0
        %1247 = vmatpush2.msra.mxu0 0.0
        %1248 = vmatprep.subr.mxu0 0.0
        %1249 = vmatpush2.msra.mxu0 0.0
        %1250 = vmatprep.subr.mxu0 0.0
        %1251 = vmatpush2.msra.mxu0 0.0
        %1252 = vmatprep.subr.mxu0 0.0
        %1253 = vmatpush2.msra.mxu0 0.0
        %1254 = vmatprep.mubr.f32.mxu0 0.0
        %1255 = vmatmul.mubr.f32.gmra.mxu0 %v952
        %v1256 = vpop.f32.mrf.mxu0
        %v1257 = vadd.f32 0.0, %v1256
        %v1258 = vpop.f32.mrf.mxu0
        %1259 = vmatprep.mubr.f32.mxu0 0.0
        %1260 = vmatmul.mubr.f32.gmra.mxu0 %v957
        %v1261 = vpop.f32.mrf.mxu0
        %v1262 = vadd.f32 0.0, %v1261
        %v1263 = vpop.f32.mrf.mxu0
        %1264 = vmatprep.mubr.f32.mxu0 0.0
        %1265 = vmatmul.mubr.f32.gmra.mxu0 %v962
        %v1266 = vpop.f32.mrf.mxu0
        %v1267 = vadd.f32 0.0, %v1266
        %v1268 = vpop.f32.mrf.mxu0
        %1269 = vmatprep.mubr.f32.mxu0 0.0
        %1270 = vmatmul.mubr.f32.gmra.mxu0 %v967
        %v1271 = vpop.f32.mrf.mxu0
        %v1272 = vadd.f32 0.0, %v1271
        %v1273 = vpop.f32.mrf.mxu0
        %1274 = vdwg.mxu0
        %v1275 = vadd.f32 %v1155, %v1257
        %v1276 = vadd.f32 %v1160, %v1262
        %v1277 = vadd.f32 %v1165, %v1267
        %v1278 = vadd.f32 %v1170, %v1272
        %v1279 = vlaneseq
        %v1280 = vshrl.u32 %v1279, 7
        %v1281 = vsub.s32 1, %v1280
        %v1282 = vrot.slane %v285, %v1281
        %v1283 = vadd.f32 %v1275, %v1282
        %v1284 = vadd.f32 %v1276, %v1282
        %v1285 = vadd.f32 %v1277, %v1282
        %v1286 = vadd.f32 %v1278, %v1282
        %v1287 = vmax.f32 %v1283, 0.0
        %v1288 = vmax.f32 %v1284, 0.0
        %v1289 = vmax.f32 %v1285, 0.0
        %v1290 = vmax.f32 %v1286, 0.0
        %1291 = vst [vmem:[%s284] sm:$0xff] %v1287
        %1292 = vst [vmem:[%s284 + $0x8] sm:$0xff] %v1288
        %1293 = vst [vmem:[%s284 + $0x10] sm:$0xff] %v1289
        %1294 = vst [vmem:[%s284 + $0x18] sm:$0xff] %v1290
        %s1295 = sand.u32 %s163, 1
        %s1296 = scalar_lea.sflag [#allocation4], %s1295
        %s1297 = sand.u32 %s163, 1
        %s1298 = smul.addr %s1297, 32
        %s1299 = scalar_lea.vmem [#allocation7], %s1298
        // Predicated region
        $region53: #{tpu_custom_call.1} parent=43 // pred_check
          %p1300 = pneg %p173
        $region54: #{tpu_custom_call.1} parent=43 // pred_check_branch
          %1302 = sbr.rel (%p1300) target = $region56
        $region55: #{tpu_custom_call.1} parent=43 // pred_region
          %s1304 = ssub.s32 512, 512
          %1305 = vsyncadd %s1296, %s1304
          %s1306 = smul.addr %s24, 4
          %s1307 = smul.addr %s1306, 128
          %s1308 = scalar_lea.hbm %s6, %s1307
          %s1309 = sshll.u32 %s1299, 4
          %s1310 = int_to_ptr.vmem [resolvable:$true] %s1309
          %1315 = dma.vmem_to_hbm [thread:$0]  %s1310, 512, %s1308, %s1296, 128, 128, 8
        $region56: #{tpu_custom_call.1} parent=43 // pred_fallthru
          _
      $region44: #{tpu_custom_call.1} parent=5 // pred_fallthru
        _
      %p1316 = scmp.le.s32.totalorder 2, %s19
      // Predicated region
      $region57: #{tpu_custom_call.1} parent=5 // pred_check
        %p1317 = pneg %p1316
      $region58: #{tpu_custom_call.1} parent=5 // pred_check_branch
        %1319 = sbr.rel (%p1317) target = $region60
      $region59: #{tpu_custom_call.1} parent=5 // pred_region
        %s1320 = ssub.s32 %s19, 2
        // Predicated region
        $region61: #{tpu_custom_call.1} parent=59 // pred_check
          %p1321 = pneg %p179
        $region62: #{tpu_custom_call.1} parent=59 // pred_check_branch
          %1323 = sbr.rel (%p1321) target = $region64
        $region63: #{tpu_custom_call.1} parent=59 // pred_region
          %s1324 = sand.u32 %s164, 1
          %s1325 = scalar_lea.sflag [#allocation4], %s1324
          %s1326 = sand.u32 %s164, 1
          %s1327 = smul.addr %s1326, 32
          %s1328 = scalar_lea.vmem [#allocation7], %s1327
          %1329 = dma.done %s1325, 512
        $region64: #{tpu_custom_call.1} parent=59 // pred_fallthru
          _
      $region60: #{tpu_custom_call.1} parent=5 // pred_fallthru
        _
    $region6: #{tpu_custom_call.1} parent=1 // loop_footer
      %s23 = sadd.s32 1, %s19
    $region7: #{tpu_custom_call.1} parent=1 // loop_footer_branch
      %18 = sbr.rel target = $region3
    $region8: #{tpu_custom_call.1} parent=1 // loop_exit
      _
    %1330 = vsyncpa [#allocation3], 1
    %s1331 = scalar_lea.sflag [#allocation3], 1
    %1332 = vsyncpa %s1331, 1
    %1333 = vsyncpa [#allocation6], 1
    %s1334 = scalar_lea.sflag [#allocation6], 1
    %1335 = vsyncpa %s1334, 1
    %1336 = vsyncpa [#allocation4], 1
    %s1337 = scalar_lea.sflag [#allocation4], 1
    %1338 = vsyncpa %s1337, 1

</llo_original>
